<compile_context>
chip_gen: v6e
topology: v6e:2x2x1
jax: 0.10.0
libtpu: 0.0.40
codegen_flags: <defaults>
</compile_context>

<pallas_src>
import functools

import jax
import jax.numpy as jnp
from jax import lax
from jax.experimental import pallas as pl
from jax.experimental.pallas import tpu as pltpu

# Deterministic "parameters" of the synthetic detectors.
NDVI_THRESH = 0.2   # plant_detector threshold on NDVI
ROW_FRAC = 0.5      # fraction of a row that must be vegetated to count as a crop row


def _round_up(x, m):
    return (x + m - 1) // m * m


def _hough_cc_kernel(ndvi_ref, out_ref, *, W, Hp, Wp, max_iters):
    ndvi = ndvi_ref[0]                                   # (Hp, Wp) f32, pad < thresh

    # --- 1. plant detector: NDVI threshold -> binary mask -------------------
    mask = ndvi > jnp.float32(NDVI_THRESH)               # (Hp, Wp) bool, False in pad
    mask_f = mask.astype(jnp.float32)

    # Background plane depends only on `mask`; issue its store before the long
    # propagation loop so it retires underneath it (free epilogue shrink).
    out_ref[0, 0, :, :] = 1.0 - mask_f

    # --- 2. "hough" crop-row lines via row-occupancy reduction --------------
    row_count = jnp.sum(mask_f, axis=1, keepdims=True)   # (Hp, 1); padding adds 0
    row_line = row_count >= jnp.float32(ROW_FRAC * W)    # threshold on TRUE width W
    seeds = mask & jnp.broadcast_to(row_line, (Hp, Wp))  # pixels on a crop row

    # --- 3. connected components: masked min-label propagation --------------
    big = Hp * Wp + 2       # "no contribution" fill for the min
    offset = big            # seed pixels get label - offset (=> negative labels)
    row_idx = lax.broadcasted_iota(jnp.int32, (Hp, Wp), 0)
    col_idx = lax.broadcasted_iota(jnp.int32, (Hp, Wp), 1)
    lin = row_idx * Wp + col_idx + 1                     # 1 .. Hp*Wp
    init = jnp.where(mask, jnp.where(seeds, lin - offset, lin), big)
    blocked0 = jnp.where(mask, 0, 1).astype(jnp.int32)   # background blocks propagation

    def shift(x, dist, axis, fill):
        """out[i] = x[i - dist] along `axis`; out-of-range positions -> fill.

        Uses a circular pltpu.roll plus a static iota mask so image edges never
        wrap into each other (no padding ring needed)."""
        size = Hp if axis == 0 else Wp
        idx = row_idx if axis == 0 else col_idx
        rolled = pltpu.roll(x, dist % size, axis=axis)
        oob = (idx < dist) if dist > 0 else (idx >= size + dist)
        return jnp.where(oob, fill, rolled)

    def seg_scan(v, axis, direction):
        """Inclusive segmented running-min along `axis` (direction = +/-1).

        Segments are maximal runs of mask pixels; background pixels reset the
        scan, so labels never cross background gaps.  Hillis-Steele, log2(size)
        unrolled steps; out-of-range shifts contribute the monoid identity
        (value=big, flag=0)."""
        size = Hp if axis == 0 else Wp
        f = blocked0
        d = 1
        while d < size:                    # static unroll
            sh = d * direction
            v_sh = shift(v, sh, axis, big)
            f_sh = shift(f, sh, axis, 0)
            v = jnp.where(f > 0, v, jnp.minimum(v, v_sh))
            f = jnp.maximum(f, f_sh)
            d *= 2
        return v

    def step_3x3(v):
        """One radius-1 8-connected min step (separable 3x3 min, edge-masked)."""
        up = shift(v, 1, 0, big)
        dn = shift(v, -1, 0, big)
        vert = jnp.minimum(jnp.minimum(up, dn), v)
        lf = shift(vert, 1, 1, big)
        rt = shift(vert, -1, 1, big)
        m = jnp.minimum(jnp.minimum(lf, rt), vert)
        # Keep non-mask pixels at `big` so labels never bridge background gaps.
        return jnp.where(mask, m, big)

    def cond_fun(carry):
        _, changed, it = carry
        return jnp.logical_and(changed > 0, it < max_iters)

    def body_fun(carry):
        cur, _, it = carry
        # Exact 8-connectivity (diagonal hops) ...
        v = step_3x3(cur)
        # ... then full-length row/column segmented min sweeps: converges in
        # O(#direction changes of the component shapes) outer iterations.
        v = seg_scan(v, axis=1, direction=+1)
        v = seg_scan(v, axis=1, direction=-1)
        v = seg_scan(v, axis=0, direction=+1)
        v = seg_scan(v, axis=0, direction=-1)
        # Monotone non-increasing -> cheap int32 change detection.
        changed = jnp.max(cur - v)
        return v, changed, it + 1

    final, _, _ = lax.while_loop(cond_fun, body_fun,
                                 (init, jnp.int32(1), jnp.int32(0)))

    labels = jnp.where(mask, final, 0)                    # 0 on background

    # --- 4. crop / weed / background split ----------------------------------
    crop_mask = labels < 0                                # component touched a row line
    crops = jnp.where(crop_mask, labels + offset, 0).astype(jnp.float32)
    weeds = jnp.where(mask & jnp.logical_not(crop_mask), labels, 0).astype(jnp.float32)

    # --- 5. degenerate case: no row/component intersection ------------------
    has_crop = jnp.max(seeds.astype(jnp.float32), keepdims=True) > 0.0    # (1, 1)

    out_ref[0, 1, :, :] = jnp.where(has_crop, crops, jnp.zeros_like(crops))
    out_ref[0, 2, :, :] = jnp.where(has_crop, weeds, mask_f)


def _vmem_limit_bytes():
    """Generation-aware scoped-VMEM budget.

    ~7/8 of physical VMEM, capped at 112 MiB: ≈56 MiB on v7x (64 MiB physical,
    leave headroom for double-buffered I/O), 112 MiB on v5e/v6e (128 MiB)."""
    cap = 64 * 1024 * 1024
    try:
        info = pltpu.get_tpu_info()
        cap = int(getattr(info, "vmem_capacity_bytes", cap) or cap)
    except Exception:
        pass
    return min(cap * 7 // 8, 112 * 1024 * 1024)


def hough_cc_forward(image, ndvi):
    """image: (B, C, H, W) f32 (unused, batch only); ndvi: (B, H, W) f32.

    Returns logits of shape (3*B, H, W) float32 (as in the PyTorch forward's
    ModelOutput(logits=torch.cat(segmentations))).
    """
    B, _, H, W = image.shape

    # Lane/sublane-aligned working shape so the whole hot loop and the output
    # writeback are full-tile ops; padded NDVI is below threshold -> background.
    Hp = _round_up(max(H, 8), 8)
    Wp = _round_up(max(W, 128), 128)
    ndvi_p = jnp.pad(ndvi.astype(jnp.float32),
                     ((0, 0), (0, Hp - H), (0, Wp - W)),
                     constant_values=-2.0)

    max_iters = Hp * Wp  # safe worst-case bound; the while_loop exits on convergence

    out = pl.pallas_call(
        functools.partial(_hough_cc_kernel, W=W, Hp=Hp, Wp=Wp, max_iters=max_iters),
        out_shape=jax.ShapeDtypeStruct((B, 3, Hp, Wp), jnp.float32),
        grid_spec=pltpu.PrefetchScalarGridSpec(
            num_scalar_prefetch=0,
            grid=(B,),
            in_specs=[pl.BlockSpec((1, Hp, Wp), lambda b: (b, 0, 0))],
            out_specs=pl.BlockSpec((1, 3, Hp, Wp), lambda b: (b, 0, 0, 0)),
        ),
        compiler_params=pltpu.CompilerParams(
            # Batch elements are fully independent -> shard across TCs on v7x.
            # TODO(synk): verify the batch axis actually splits across the two
            # v7x TensorCores; if not, switch to pltpu.CORE_PARALLEL / core_map
            # (and an H-halves split with a label merge for B == 1).
            dimension_semantics=("parallel",),
            vmem_limit_bytes=_vmem_limit_bytes(),
        ),
    )(ndvi_p)

    # TODO(synk): on v7x, single-buffering the output block (pl.Buffered(1))
    # would halve the largest VMEM consumer; left default-buffered for safety.
    return out[:, :, :H, :W].reshape(B * 3, H, W)


if __name__ == "__main__":
    key = jax.random.PRNGKey(0)
    k_img, k_ndvi = jax.random.split(key)

    B, C, H, W = 2, 4, 16, 16
    image = jax.random.normal(k_img, (B, C, H, W), dtype=jnp.float32)
    # NDVI in [-1, 1]
    ndvi = jax.random.uniform(k_ndvi, (B, H, W), minval=-1.0, maxval=1.0,
                              dtype=jnp.float32)

    logits = hough_cc_forward(image, ndvi)
    jax.block_until_ready(logits)
    assert logits.shape == (3 * B, H, W), logits.shape
    print("KERNEL_OK")
</pallas_src>

<mosaic_0001>
module attributes {stable_mosaic.version = 11 : i64} {
  func.func @_hough_cc_kernel(%arg0: i32, %arg1: memref<1x16x128xf32, #tpu.memory_space<vmem>>, %arg2: memref<1x3x16x128xf32, #tpu.memory_space<vmem>>) attributes {dimension_semantics = [#tpu.dimension_semantics<parallel>], iteration_bounds = array<i64: 2>, scalar_prefetch = 0 : i64, scratch_operands = 0 : i64, tpu.core_type = #tpu.core_type<tc>, window_params = [{transform_indices = @transform_0, window_bounds = array<i64: 1, 16, 128>}, {transform_indices = @transform_1, window_bounds = array<i64: 1, 3, 16, 128>}]} {
    %c0 = arith.constant 0 : index
    %c0_0 = arith.constant 0 : index
    %c0_1 = arith.constant 0 : index
    %0 = vector.load %arg1[%c0, %c0_0, %c0_1] : memref<1x16x128xf32, #tpu.memory_space<vmem>>, vector<1x16x128xf32>
    %1 = vector.shape_cast %0 : vector<1x16x128xf32> to vector<16x128xf32>
    %cst = arith.constant 2.000000e-01 : f32
    %2 = vector.broadcast %cst : f32 to vector<16x128xf32>
    %3 = arith.cmpf ogt, %1, %2 : vector<16x128xf32>
    %4 = arith.extui %3 : vector<16x128xi1> to vector<16x128xi32>
    %5 = arith.sitofp %4 : vector<16x128xi32> to vector<16x128xf32>
    %cst_2 = arith.constant 1.000000e+00 : f32
    %6 = vector.broadcast %cst_2 : f32 to vector<16x128xf32>
    %7 = arith.subf %6, %5 : vector<16x128xf32>
    %c0_3 = arith.constant 0 : index
    %c0_4 = arith.constant 0 : index
    %c0_5 = arith.constant 0 : index
    %c0_6 = arith.constant 0 : index
    %8 = vector.load %arg2[%c0_3, %c0_4, %c0_5, %c0_6] : memref<1x3x16x128xf32, #tpu.memory_space<vmem>>, vector<1x1x16x128xf32>
    %9 = vector.shape_cast %8 : vector<1x1x16x128xf32> to vector<16x128xf32>
    %10 = vector.shape_cast %7 : vector<16x128xf32> to vector<1x1x16x128xf32>
    tpu.vector_store %arg2[%c0_3, %c0_4, %c0_5, %c0_6], %10 {strides = array<i32>} : memref<1x3x16x128xf32, #tpu.memory_space<vmem>>, vector<1x1x16x128xf32>,
    %cst_7 = arith.constant dense<0.000000e+00> : vector<16xf32>
    %11 = vector.multi_reduction <add>, %5, %cst_7 [1] : vector<16x128xf32> to vector<16xf32>
    %12 = vector.shape_cast %11 : vector<16xf32> to vector<16x1xf32>
    %cst_8 = arith.constant 8.000000e+00 : f32
    %13 = vector.broadcast %cst_8 : f32 to vector<16x1xf32>
    %14 = arith.cmpf oge, %12, %13 : vector<16x1xf32>
    %15 = vector.shape_cast %14 : vector<16x1xi1> to vector<16x1xi1>
    %16 = vector.broadcast %15 : vector<16x1xi1> to vector<16x128xi1>
    %17 = arith.andi %3, %16 : vector<16x128xi1>
    %18 = tpu.iota {dimensions = array<i32: 0>} : vector<16x128xi32>
    %19 = tpu.iota {dimensions = array<i32: 1>} : vector<16x128xi32>
    %c128_i32 = arith.constant 128 : i32
    %20 = vector.broadcast %c128_i32 : i32 to vector<16x128xi32>
    %21 = arith.muli %18, %20 : vector<16x128xi32>
    %22 = arith.addi %21, %19 : vector<16x128xi32>
    %c1_i32 = arith.constant 1 : i32
    %23 = vector.broadcast %c1_i32 : i32 to vector<16x128xi32>
    %24 = arith.addi %22, %23 : vector<16x128xi32>
    %c2050_i32 = arith.constant 2050 : i32
    %25 = vector.broadcast %c2050_i32 : i32 to vector<16x128xi32>
    %26 = arith.subi %24, %25 : vector<16x128xi32>
    %27 = arith.select %17, %26, %24 : vector<16x128xi1>, vector<16x128xi32>
    %c2050_i32_9 = arith.constant 2050 : i32
    %28 = vector.broadcast %c2050_i32_9 : i32 to vector<16x128xi32>
    %29 = arith.select %3, %27, %28 : vector<16x128xi1>, vector<16x128xi32>
    %c0_i32 = arith.constant 0 : i32
    %c1_i32_10 = arith.constant 1 : i32
    %30 = vector.broadcast %c0_i32 : i32 to vector<16x128xi32>
    %31 = vector.broadcast %c1_i32_10 : i32 to vector<16x128xi32>
    %32 = arith.select %3, %30, %31 : vector<16x128xi1>, vector<16x128xi32>
    %c1_i32_11 = arith.constant 1 : i32
    %c0_i32_12 = arith.constant 0 : i32
    %33:3 = scf.while (%arg3 = %29, %arg4 = %c1_i32_11, %arg5 = %c0_i32_12) : (vector<16x128xi32>, i32, i32) -> (vector<16x128xi32>, i32, i32) {
      %c0_i32_28 = arith.constant 0 : i32
      %70 = arith.cmpi sgt, %arg4, %c0_i32_28 : i32
      %c2048_i32 = arith.constant 2048 : i32
      %71 = arith.cmpi slt, %arg5, %c2048_i32 : i32
      %72 = arith.andi %70, %71 : i1
      scf.condition(%72) %arg3, %arg4, %arg5 : vector<16x128xi32>, i32, i32
    } do {
    ^bb0(%arg3: vector<16x128xi32>, %arg4: i32, %arg5: i32):
      %c1_i32_28 = arith.constant 1 : i32
      %70 = tpu.dynamic_rotate %arg3 by %c1_i32_28 dim 0 : vector<16x128xi32>, i32 -> vector<16x128xi32>
      %c1_i32_29 = arith.constant 1 : i32
      %71 = vector.broadcast %c1_i32_29 : i32 to vector<16x128xi32>
      %72 = arith.cmpi slt, %18, %71 : vector<16x128xi32>
      %c2050_i32_30 = arith.constant 2050 : i32
      %73 = vector.broadcast %c2050_i32_30 : i32 to vector<16x128xi32>
      %74 = arith.select %72, %73, %70 : vector<16x128xi1>, vector<16x128xi32>
      %c15_i32 = arith.constant 15 : i32
      %75 = tpu.dynamic_rotate %arg3 by %c15_i32 dim 0 : vector<16x128xi32>, i32 -> vector<16x128xi32>
      %c15_i32_31 = arith.constant 15 : i32
      %76 = vector.broadcast %c15_i32_31 : i32 to vector<16x128xi32>
      %77 = arith.cmpi sge, %18, %76 : vector<16x128xi32>
      %c2050_i32_32 = arith.constant 2050 : i32
      %78 = vector.broadcast %c2050_i32_32 : i32 to vector<16x128xi32>
      %79 = arith.select %77, %78, %75 : vector<16x128xi1>, vector<16x128xi32>
      %80 = arith.minsi %74, %79 : vector<16x128xi32>
      %81 = arith.minsi %80, %arg3 : vector<16x128xi32>
      %c1_i32_33 = arith.constant 1 : i32
      %82 = tpu.dynamic_rotate %81 by %c1_i32_33 dim 1 : vector<16x128xi32>, i32 -> vector<16x128xi32>
      %c1_i32_34 = arith.constant 1 : i32
      %83 = vector.broadcast %c1_i32_34 : i32 to vector<16x128xi32>
      %84 = arith.cmpi slt, %19, %83 : vector<16x128xi32>
      %c2050_i32_35 = arith.constant 2050 : i32
      %85 = vector.broadcast %c2050_i32_35 : i32 to vector<16x128xi32>
      %86 = arith.select %84, %85, %82 : vector<16x128xi1>, vector<16x128xi32>
      %c127_i32 = arith.constant 127 : i32
      %87 = tpu.dynamic_rotate %81 by %c127_i32 dim 1 : vector<16x128xi32>, i32 -> vector<16x128xi32>
      %c127_i32_36 = arith.constant 127 : i32
      %88 = vector.broadcast %c127_i32_36 : i32 to vector<16x128xi32>
      %89 = arith.cmpi sge, %19, %88 : vector<16x128xi32>
      %c2050_i32_37 = arith.constant 2050 : i32
      %90 = vector.broadcast %c2050_i32_37 : i32 to vector<16x128xi32>
      %91 = arith.select %89, %90, %87 : vector<16x128xi1>, vector<16x128xi32>
      %92 = arith.minsi %86, %91 : vector<16x128xi32>
      %93 = arith.minsi %92, %81 : vector<16x128xi32>
      %c2050_i32_38 = arith.constant 2050 : i32
      %94 = vector.broadcast %c2050_i32_38 : i32 to vector<16x128xi32>
      %95 = arith.select %3, %93, %94 : vector<16x128xi1>, vector<16x128xi32>
      %c1_i32_39 = arith.constant 1 : i32
      %96 = tpu.dynamic_rotate %95 by %c1_i32_39 dim 1 : vector<16x128xi32>, i32 -> vector<16x128xi32>
      %c1_i32_40 = arith.constant 1 : i32
      %97 = vector.broadcast %c1_i32_40 : i32 to vector<16x128xi32>
      %98 = arith.cmpi slt, %19, %97 : vector<16x128xi32>
      %c2050_i32_41 = arith.constant 2050 : i32
      %99 = vector.broadcast %c2050_i32_41 : i32 to vector<16x128xi32>
      %100 = arith.select %98, %99, %96 : vector<16x128xi1>, vector<16x128xi32>
      %c1_i32_42 = arith.constant 1 : i32
      %101 = tpu.dynamic_rotate %32 by %c1_i32_42 dim 1 : vector<16x128xi32>, i32 -> vector<16x128xi32>
      %c1_i32_43 = arith.constant 1 : i32
      %102 = vector.broadcast %c1_i32_43 : i32 to vector<16x128xi32>
      %103 = arith.cmpi slt, %19, %102 : vector<16x128xi32>
      %c0_i32_44 = arith.constant 0 : i32
      %104 = vector.broadcast %c0_i32_44 : i32 to vector<16x128xi32>
      %105 = arith.select %103, %104, %101 : vector<16x128xi1>, vector<16x128xi32>
      %c0_i32_45 = arith.constant 0 : i32
      %106 = vector.broadcast %c0_i32_45 : i32 to vector<16x128xi32>
      %107 = arith.cmpi sgt, %32, %106 : vector<16x128xi32>
      %108 = arith.minsi %95, %100 : vector<16x128xi32>
      %109 = arith.select %107, %95, %108 : vector<16x128xi1>, vector<16x128xi32>
      %110 = arith.maxsi %32, %105 : vector<16x128xi32>
      %c2_i32 = arith.constant 2 : i32
      %111 = tpu.dynamic_rotate %109 by %c2_i32 dim 1 : vector<16x128xi32>, i32 -> vector<16x128xi32>
      %c2_i32_46 = arith.constant 2 : i32
      %112 = vector.broadcast %c2_i32_46 : i32 to vector<16x128xi32>
      %113 = arith.cmpi slt, %19, %112 : vector<16x128xi32>
      %c2050_i32_47 = arith.constant 2050 : i32
      %114 = vector.broadcast %c2050_i32_47 : i32 to vector<16x128xi32>
      %115 = arith.select %113, %114, %111 : vector<16x128xi1>, vector<16x128xi32>
      %c2_i32_48 = arith.constant 2 : i32
      %116 = tpu.dynamic_rotate %110 by %c2_i32_48 dim 1 : vector<16x128xi32>, i32 -> vector<16x128xi32>
      %c2_i32_49 = arith.constant 2 : i32
      %117 = vector.broadcast %c2_i32_49 : i32 to vector<16x128xi32>
      %118 = arith.cmpi slt, %19, %117 : vector<16x128xi32>
      %c0_i32_50 = arith.constant 0 : i32
      %119 = vector.broadcast %c0_i32_50 : i32 to vector<16x128xi32>
      %120 = arith.select %118, %119, %116 : vector<16x128xi1>, vector<16x128xi32>
      %c0_i32_51 = arith.constant 0 : i32
      %121 = vector.broadcast %c0_i32_51 : i32 to vector<16x128xi32>
      %122 = arith.cmpi sgt, %110, %121 : vector<16x128xi32>
      %123 = arith.minsi %109, %115 : vector<16x128xi32>
      %124 = arith.select %122, %109, %123 : vector<16x128xi1>, vector<16x128xi32>
      %125 = arith.maxsi %110, %120 : vector<16x128xi32>
      %c4_i32 = arith.constant 4 : i32
      %126 = tpu.dynamic_rotate %124 by %c4_i32 dim 1 : vector<16x128xi32>, i32 -> vector<16x128xi32>
      %c4_i32_52 = arith.constant 4 : i32
      %127 = vector.broadcast %c4_i32_52 : i32 to vector<16x128xi32>
      %128 = arith.cmpi slt, %19, %127 : vector<16x128xi32>
      %c2050_i32_53 = arith.constant 2050 : i32
      %129 = vector.broadcast %c2050_i32_53 : i32 to vector<16x128xi32>
      %130 = arith.select %128, %129, %126 : vector<16x128xi1>, vector<16x128xi32>
      %c4_i32_54 = arith.constant 4 : i32
      %131 = tpu.dynamic_rotate %125 by %c4_i32_54 dim 1 : vector<16x128xi32>, i32 -> vector<16x128xi32>
      %c4_i32_55 = arith.constant 4 : i32
      %132 = vector.broadcast %c4_i32_55 : i32 to vector<16x128xi32>
      %133 = arith.cmpi slt, %19, %132 : vector<16x128xi32>
      %c0_i32_56 = arith.constant 0 : i32
      %134 = vector.broadcast %c0_i32_56 : i32 to vector<16x128xi32>
      %135 = arith.select %133, %134, %131 : vector<16x128xi1>, vector<16x128xi32>
      %c0_i32_57 = arith.constant 0 : i32
      %136 = vector.broadcast %c0_i32_57 : i32 to vector<16x128xi32>
      %137 = arith.cmpi sgt, %125, %136 : vector<16x128xi32>
      %138 = arith.minsi %124, %130 : vector<16x128xi32>
      %139 = arith.select %137, %124, %138 : vector<16x128xi1>, vector<16x128xi32>
      %140 = arith.maxsi %125, %135 : vector<16x128xi32>
      %c8_i32 = arith.constant 8 : i32
      %141 = tpu.dynamic_rotate %139 by %c8_i32 dim 1 : vector<16x128xi32>, i32 -> vector<16x128xi32>
      %c8_i32_58 = arith.constant 8 : i32
      %142 = vector.broadcast %c8_i32_58 : i32 to vector<16x128xi32>
      %143 = arith.cmpi slt, %19, %142 : vector<16x128xi32>
      %c2050_i32_59 = arith.constant 2050 : i32
      %144 = vector.broadcast %c2050_i32_59 : i32 to vector<16x128xi32>
      %145 = arith.select %143, %144, %141 : vector<16x128xi1>, vector<16x128xi32>
      %c8_i32_60 = arith.constant 8 : i32
      %146 = tpu.dynamic_rotate %140 by %c8_i32_60 dim 1 : vector<16x128xi32>, i32 -> vector<16x128xi32>
      %c8_i32_61 = arith.constant 8 : i32
      %147 = vector.broadcast %c8_i32_61 : i32 to vector<16x128xi32>
      %148 = arith.cmpi slt, %19, %147 : vector<16x128xi32>
      %c0_i32_62 = arith.constant 0 : i32
      %149 = vector.broadcast %c0_i32_62 : i32 to vector<16x128xi32>
      %150 = arith.select %148, %149, %146 : vector<16x128xi1>, vector<16x128xi32>
      %c0_i32_63 = arith.constant 0 : i32
      %151 = vector.broadcast %c0_i32_63 : i32 to vector<16x128xi32>
      %152 = arith.cmpi sgt, %140, %151 : vector<16x128xi32>
      %153 = arith.minsi %139, %145 : vector<16x128xi32>
      %154 = arith.select %152, %139, %153 : vector<16x128xi1>, vector<16x128xi32>
      %155 = arith.maxsi %140, %150 : vector<16x128xi32>
      %c16_i32 = arith.constant 16 : i32
      %156 = tpu.dynamic_rotate %154 by %c16_i32 dim 1 : vector<16x128xi32>, i32 -> vector<16x128xi32>
      %c16_i32_64 = arith.constant 16 : i32
      %157 = vector.broadcast %c16_i32_64 : i32 to vector<16x128xi32>
      %158 = arith.cmpi slt, %19, %157 : vector<16x128xi32>
      %c2050_i32_65 = arith.constant 2050 : i32
      %159 = vector.broadcast %c2050_i32_65 : i32 to vector<16x128xi32>
      %160 = arith.select %158, %159, %156 : vector<16x128xi1>, vector<16x128xi32>
      %c16_i32_66 = arith.constant 16 : i32
      %161 = tpu.dynamic_rotate %155 by %c16_i32_66 dim 1 : vector<16x128xi32>, i32 -> vector<16x128xi32>
      %c16_i32_67 = arith.constant 16 : i32
      %162 = vector.broadcast %c16_i32_67 : i32 to vector<16x128xi32>
      %163 = arith.cmpi slt, %19, %162 : vector<16x128xi32>
      %c0_i32_68 = arith.constant 0 : i32
      %164 = vector.broadcast %c0_i32_68 : i32 to vector<16x128xi32>
      %165 = arith.select %163, %164, %161 : vector<16x128xi1>, vector<16x128xi32>
      %c0_i32_69 = arith.constant 0 : i32
      %166 = vector.broadcast %c0_i32_69 : i32 to vector<16x128xi32>
      %167 = arith.cmpi sgt, %155, %166 : vector<16x128xi32>
      %168 = arith.minsi %154, %160 : vector<16x128xi32>
      %169 = arith.select %167, %154, %168 : vector<16x128xi1>, vector<16x128xi32>
      %170 = arith.maxsi %155, %165 : vector<16x128xi32>
      %c32_i32 = arith.constant 32 : i32
      %171 = tpu.dynamic_rotate %169 by %c32_i32 dim 1 : vector<16x128xi32>, i32 -> vector<16x128xi32>
      %c32_i32_70 = arith.constant 32 : i32
      %172 = vector.broadcast %c32_i32_70 : i32 to vector<16x128xi32>
      %173 = arith.cmpi slt, %19, %172 : vector<16x128xi32>
      %c2050_i32_71 = arith.constant 2050 : i32
      %174 = vector.broadcast %c2050_i32_71 : i32 to vector<16x128xi32>
      %175 = arith.select %173, %174, %171 : vector<16x128xi1>, vector<16x128xi32>
      %c32_i32_72 = arith.constant 32 : i32
      %176 = tpu.dynamic_rotate %170 by %c32_i32_72 dim 1 : vector<16x128xi32>, i32 -> vector<16x128xi32>
      %c32_i32_73 = arith.constant 32 : i32
      %177 = vector.broadcast %c32_i32_73 : i32 to vector<16x128xi32>
      %178 = arith.cmpi slt, %19, %177 : vector<16x128xi32>
      %c0_i32_74 = arith.constant 0 : i32
      %179 = vector.broadcast %c0_i32_74 : i32 to vector<16x128xi32>
      %180 = arith.select %178, %179, %176 : vector<16x128xi1>, vector<16x128xi32>
      %c0_i32_75 = arith.constant 0 : i32
      %181 = vector.broadcast %c0_i32_75 : i32 to vector<16x128xi32>
      %182 = arith.cmpi sgt, %170, %181 : vector<16x128xi32>
      %183 = arith.minsi %169, %175 : vector<16x128xi32>
      %184 = arith.select %182, %169, %183 : vector<16x128xi1>, vector<16x128xi32>
      %185 = arith.maxsi %170, %180 : vector<16x128xi32>
      %c64_i32 = arith.constant 64 : i32
      %186 = tpu.dynamic_rotate %184 by %c64_i32 dim 1 : vector<16x128xi32>, i32 -> vector<16x128xi32>
      %c64_i32_76 = arith.constant 64 : i32
      %187 = vector.broadcast %c64_i32_76 : i32 to vector<16x128xi32>
      %188 = arith.cmpi slt, %19, %187 : vector<16x128xi32>
      %c2050_i32_77 = arith.constant 2050 : i32
      %189 = vector.broadcast %c2050_i32_77 : i32 to vector<16x128xi32>
      %190 = arith.select %188, %189, %186 : vector<16x128xi1>, vector<16x128xi32>
      %c64_i32_78 = arith.constant 64 : i32
      %191 = tpu.dynamic_rotate %185 by %c64_i32_78 dim 1 : vector<16x128xi32>, i32 -> vector<16x128xi32>
      %c64_i32_79 = arith.constant 64 : i32
      %192 = vector.broadcast %c64_i32_79 : i32 to vector<16x128xi32>
      %193 = arith.cmpi slt, %19, %192 : vector<16x128xi32>
      %c0_i32_80 = arith.constant 0 : i32
      %194 = vector.broadcast %c0_i32_80 : i32 to vector<16x128xi32>
      %195 = arith.select %193, %194, %191 : vector<16x128xi1>, vector<16x128xi32>
      %c0_i32_81 = arith.constant 0 : i32
      %196 = vector.broadcast %c0_i32_81 : i32 to vector<16x128xi32>
      %197 = arith.cmpi sgt, %185, %196 : vector<16x128xi32>
      %198 = arith.minsi %184, %190 : vector<16x128xi32>
      %199 = arith.select %197, %184, %198 : vector<16x128xi1>, vector<16x128xi32>
      %200 = arith.maxsi %185, %195 : vector<16x128xi32>
      %c127_i32_82 = arith.constant 127 : i32
      %201 = tpu.dynamic_rotate %199 by %c127_i32_82 dim 1 : vector<16x128xi32>, i32 -> vector<16x128xi32>
      %c127_i32_83 = arith.constant 127 : i32
      %202 = vector.broadcast %c127_i32_83 : i32 to vector<16x128xi32>
      %203 = arith.cmpi sge, %19, %202 : vector<16x128xi32>
      %c2050_i32_84 = arith.constant 2050 : i32
      %204 = vector.broadcast %c2050_i32_84 : i32 to vector<16x128xi32>
      %205 = arith.select %203, %204, %201 : vector<16x128xi1>, vector<16x128xi32>
      %c127_i32_85 = arith.constant 127 : i32
      %206 = tpu.dynamic_rotate %32 by %c127_i32_85 dim 1 : vector<16x128xi32>, i32 -> vector<16x128xi32>
      %c127_i32_86 = arith.constant 127 : i32
      %207 = vector.broadcast %c127_i32_86 : i32 to vector<16x128xi32>
      %208 = arith.cmpi sge, %19, %207 : vector<16x128xi32>
      %c0_i32_87 = arith.constant 0 : i32
      %209 = vector.broadcast %c0_i32_87 : i32 to vector<16x128xi32>
      %210 = arith.select %208, %209, %206 : vector<16x128xi1>, vector<16x128xi32>
      %c0_i32_88 = arith.constant 0 : i32
      %211 = vector.broadcast %c0_i32_88 : i32 to vector<16x128xi32>
      %212 = arith.cmpi sgt, %32, %211 : vector<16x128xi32>
      %213 = arith.minsi %199, %205 : vector<16x128xi32>
      %214 = arith.select %212, %199, %213 : vector<16x128xi1>, vector<16x128xi32>
      %215 = arith.maxsi %32, %210 : vector<16x128xi32>
      %c126_i32 = arith.constant 126 : i32
      %216 = tpu.dynamic_rotate %214 by %c126_i32 dim 1 : vector<16x128xi32>, i32 -> vector<16x128xi32>
      %c126_i32_89 = arith.constant 126 : i32
      %217 = vector.broadcast %c126_i32_89 : i32 to vector<16x128xi32>
      %218 = arith.cmpi sge, %19, %217 : vector<16x128xi32>
      %c2050_i32_90 = arith.constant 2050 : i32
      %219 = vector.broadcast %c2050_i32_90 : i32 to vector<16x128xi32>
      %220 = arith.select %218, %219, %216 : vector<16x128xi1>, vector<16x128xi32>
      %c126_i32_91 = arith.constant 126 : i32
      %221 = tpu.dynamic_rotate %215 by %c126_i32_91 dim 1 : vector<16x128xi32>, i32 -> vector<16x128xi32>
      %c126_i32_92 = arith.constant 126 : i32
      %222 = vector.broadcast %c126_i32_92 : i32 to vector<16x128xi32>
      %223 = arith.cmpi sge, %19, %222 : vector<16x128xi32>
      %c0_i32_93 = arith.constant 0 : i32
      %224 = vector.broadcast %c0_i32_93 : i32 to vector<16x128xi32>
      %225 = arith.select %223, %224, %221 : vector<16x128xi1>, vector<16x128xi32>
      %c0_i32_94 = arith.constant 0 : i32
      %226 = vector.broadcast %c0_i32_94 : i32 to vector<16x128xi32>
      %227 = arith.cmpi sgt, %215, %226 : vector<16x128xi32>
      %228 = arith.minsi %214, %220 : vector<16x128xi32>
      %229 = arith.select %227, %214, %228 : vector<16x128xi1>, vector<16x128xi32>
      %230 = arith.maxsi %215, %225 : vector<16x128xi32>
      %c124_i32 = arith.constant 124 : i32
      %231 = tpu.dynamic_rotate %229 by %c124_i32 dim 1 : vector<16x128xi32>, i32 -> vector<16x128xi32>
      %c124_i32_95 = arith.constant 124 : i32
      %232 = vector.broadcast %c124_i32_95 : i32 to vector<16x128xi32>
      %233 = arith.cmpi sge, %19, %232 : vector<16x128xi32>
      %c2050_i32_96 = arith.constant 2050 : i32
      %234 = vector.broadcast %c2050_i32_96 : i32 to vector<16x128xi32>
      %235 = arith.select %233, %234, %231 : vector<16x128xi1>, vector<16x128xi32>
      %c124_i32_97 = arith.constant 124 : i32
      %236 = tpu.dynamic_rotate %230 by %c124_i32_97 dim 1 : vector<16x128xi32>, i32 -> vector<16x128xi32>
      %c124_i32_98 = arith.constant 124 : i32
      %237 = vector.broadcast %c124_i32_98 : i32 to vector<16x128xi32>
      %238 = arith.cmpi sge, %19, %237 : vector<16x128xi32>
      %c0_i32_99 = arith.constant 0 : i32
      %239 = vector.broadcast %c0_i32_99 : i32 to vector<16x128xi32>
      %240 = arith.select %238, %239, %236 : vector<16x128xi1>, vector<16x128xi32>
      %c0_i32_100 = arith.constant 0 : i32
      %241 = vector.broadcast %c0_i32_100 : i32 to vector<16x128xi32>
      %242 = arith.cmpi sgt, %230, %241 : vector<16x128xi32>
      %243 = arith.minsi %229, %235 : vector<16x128xi32>
      %244 = arith.select %242, %229, %243 : vector<16x128xi1>, vector<16x128xi32>
      %245 = arith.maxsi %230, %240 : vector<16x128xi32>
      %c120_i32 = arith.constant 120 : i32
      %246 = tpu.dynamic_rotate %244 by %c120_i32 dim 1 : vector<16x128xi32>, i32 -> vector<16x128xi32>
      %c120_i32_101 = arith.constant 120 : i32
      %247 = vector.broadcast %c120_i32_101 : i32 to vector<16x128xi32>
      %248 = arith.cmpi sge, %19, %247 : vector<16x128xi32>
      %c2050_i32_102 = arith.constant 2050 : i32
      %249 = vector.broadcast %c2050_i32_102 : i32 to vector<16x128xi32>
      %250 = arith.select %248, %249, %246 : vector<16x128xi1>, vector<16x128xi32>
      %c120_i32_103 = arith.constant 120 : i32
      %251 = tpu.dynamic_rotate %245 by %c120_i32_103 dim 1 : vector<16x128xi32>, i32 -> vector<16x128xi32>
      %c120_i32_104 = arith.constant 120 : i32
      %252 = vector.broadcast %c120_i32_104 : i32 to vector<16x128xi32>
      %253 = arith.cmpi sge, %19, %252 : vector<16x128xi32>
      %c0_i32_105 = arith.constant 0 : i32
      %254 = vector.broadcast %c0_i32_105 : i32 to vector<16x128xi32>
      %255 = arith.select %253, %254, %251 : vector<16x128xi1>, vector<16x128xi32>
      %c0_i32_106 = arith.constant 0 : i32
      %256 = vector.broadcast %c0_i32_106 : i32 to vector<16x128xi32>
      %257 = arith.cmpi sgt, %245, %256 : vector<16x128xi32>
      %258 = arith.minsi %244, %250 : vector<16x128xi32>
      %259 = arith.select %257, %244, %258 : vector<16x128xi1>, vector<16x128xi32>
      %260 = arith.maxsi %245, %255 : vector<16x128xi32>
      %c112_i32 = arith.constant 112 : i32
      %261 = tpu.dynamic_rotate %259 by %c112_i32 dim 1 : vector<16x128xi32>, i32 -> vector<16x128xi32>
      %c112_i32_107 = arith.constant 112 : i32
      %262 = vector.broadcast %c112_i32_107 : i32 to vector<16x128xi32>
      %263 = arith.cmpi sge, %19, %262 : vector<16x128xi32>
      %c2050_i32_108 = arith.constant 2050 : i32
      %264 = vector.broadcast %c2050_i32_108 : i32 to vector<16x128xi32>
      %265 = arith.select %263, %264, %261 : vector<16x128xi1>, vector<16x128xi32>
      %c112_i32_109 = arith.constant 112 : i32
      %266 = tpu.dynamic_rotate %260 by %c112_i32_109 dim 1 : vector<16x128xi32>, i32 -> vector<16x128xi32>
      %c112_i32_110 = arith.constant 112 : i32
      %267 = vector.broadcast %c112_i32_110 : i32 to vector<16x128xi32>
      %268 = arith.cmpi sge, %19, %267 : vector<16x128xi32>
      %c0_i32_111 = arith.constant 0 : i32
      %269 = vector.broadcast %c0_i32_111 : i32 to vector<16x128xi32>
      %270 = arith.select %268, %269, %266 : vector<16x128xi1>, vector<16x128xi32>
      %c0_i32_112 = arith.constant 0 : i32
      %271 = vector.broadcast %c0_i32_112 : i32 to vector<16x128xi32>
      %272 = arith.cmpi sgt, %260, %271 : vector<16x128xi32>
      %273 = arith.minsi %259, %265 : vector<16x128xi32>
      %274 = arith.select %272, %259, %273 : vector<16x128xi1>, vector<16x128xi32>
      %275 = arith.maxsi %260, %270 : vector<16x128xi32>
      %c96_i32 = arith.constant 96 : i32
      %276 = tpu.dynamic_rotate %274 by %c96_i32 dim 1 : vector<16x128xi32>, i32 -> vector<16x128xi32>
      %c96_i32_113 = arith.constant 96 : i32
      %277 = vector.broadcast %c96_i32_113 : i32 to vector<16x128xi32>
      %278 = arith.cmpi sge, %19, %277 : vector<16x128xi32>
      %c2050_i32_114 = arith.constant 2050 : i32
      %279 = vector.broadcast %c2050_i32_114 : i32 to vector<16x128xi32>
      %280 = arith.select %278, %279, %276 : vector<16x128xi1>, vector<16x128xi32>
      %c96_i32_115 = arith.constant 96 : i32
      %281 = tpu.dynamic_rotate %275 by %c96_i32_115 dim 1 : vector<16x128xi32>, i32 -> vector<16x128xi32>
      %c96_i32_116 = arith.constant 96 : i32
      %282 = vector.broadcast %c96_i32_116 : i32 to vector<16x128xi32>
      %283 = arith.cmpi sge, %19, %282 : vector<16x128xi32>
      %c0_i32_117 = arith.constant 0 : i32
      %284 = vector.broadcast %c0_i32_117 : i32 to vector<16x128xi32>
      %285 = arith.select %283, %284, %281 : vector<16x128xi1>, vector<16x128xi32>
      %c0_i32_118 = arith.constant 0 : i32
      %286 = vector.broadcast %c0_i32_118 : i32 to vector<16x128xi32>
      %287 = arith.cmpi sgt, %275, %286 : vector<16x128xi32>
      %288 = arith.minsi %274, %280 : vector<16x128xi32>
      %289 = arith.select %287, %274, %288 : vector<16x128xi1>, vector<16x128xi32>
      %290 = arith.maxsi %275, %285 : vector<16x128xi32>
      %c64_i32_119 = arith.constant 64 : i32
      %291 = tpu.dynamic_rotate %289 by %c64_i32_119 dim 1 : vector<16x128xi32>, i32 -> vector<16x128xi32>
      %c64_i32_120 = arith.constant 64 : i32
      %292 = vector.broadcast %c64_i32_120 : i32 to vector<16x128xi32>
      %293 = arith.cmpi sge, %19, %292 : vector<16x128xi32>
      %c2050_i32_121 = arith.constant 2050 : i32
      %294 = vector.broadcast %c2050_i32_121 : i32 to vector<16x128xi32>
      %295 = arith.select %293, %294, %291 : vector<16x128xi1>, vector<16x128xi32>
      %c64_i32_122 = arith.constant 64 : i32
      %296 = tpu.dynamic_rotate %290 by %c64_i32_122 dim 1 : vector<16x128xi32>, i32 -> vector<16x128xi32>
      %c64_i32_123 = arith.constant 64 : i32
      %297 = vector.broadcast %c64_i32_123 : i32 to vector<16x128xi32>
      %298 = arith.cmpi sge, %19, %297 : vector<16x128xi32>
      %c0_i32_124 = arith.constant 0 : i32
      %299 = vector.broadcast %c0_i32_124 : i32 to vector<16x128xi32>
      %300 = arith.select %298, %299, %296 : vector<16x128xi1>, vector<16x128xi32>
      %c0_i32_125 = arith.constant 0 : i32
      %301 = vector.broadcast %c0_i32_125 : i32 to vector<16x128xi32>
      %302 = arith.cmpi sgt, %290, %301 : vector<16x128xi32>
      %303 = arith.minsi %289, %295 : vector<16x128xi32>
      %304 = arith.select %302, %289, %303 : vector<16x128xi1>, vector<16x128xi32>
      %305 = arith.maxsi %290, %300 : vector<16x128xi32>
      %c1_i32_126 = arith.constant 1 : i32
      %306 = tpu.dynamic_rotate %304 by %c1_i32_126 dim 0 : vector<16x128xi32>, i32 -> vector<16x128xi32>
      %c1_i32_127 = arith.constant 1 : i32
      %307 = vector.broadcast %c1_i32_127 : i32 to vector<16x128xi32>
      %308 = arith.cmpi slt, %18, %307 : vector<16x128xi32>
      %c2050_i32_128 = arith.constant 2050 : i32
      %309 = vector.broadcast %c2050_i32_128 : i32 to vector<16x128xi32>
      %310 = arith.select %308, %309, %306 : vector<16x128xi1>, vector<16x128xi32>
      %c1_i32_129 = arith.constant 1 : i32
      %311 = tpu.dynamic_rotate %32 by %c1_i32_129 dim 0 : vector<16x128xi32>, i32 -> vector<16x128xi32>
      %c1_i32_130 = arith.constant 1 : i32
      %312 = vector.broadcast %c1_i32_130 : i32 to vector<16x128xi32>
      %313 = arith.cmpi slt, %18, %312 : vector<16x128xi32>
      %c0_i32_131 = arith.constant 0 : i32
      %314 = vector.broadcast %c0_i32_131 : i32 to vector<16x128xi32>
      %315 = arith.select %313, %314, %311 : vector<16x128xi1>, vector<16x128xi32>
      %c0_i32_132 = arith.constant 0 : i32
      %316 = vector.broadcast %c0_i32_132 : i32 to vector<16x128xi32>
      %317 = arith.cmpi sgt, %32, %316 : vector<16x128xi32>
      %318 = arith.minsi %304, %310 : vector<16x128xi32>
      %319 = arith.select %317, %304, %318 : vector<16x128xi1>, vector<16x128xi32>
      %320 = arith.maxsi %32, %315 : vector<16x128xi32>
      %c2_i32_133 = arith.constant 2 : i32
      %321 = tpu.dynamic_rotate %319 by %c2_i32_133 dim 0 : vector<16x128xi32>, i32 -> vector<16x128xi32>
      %c2_i32_134 = arith.constant 2 : i32
      %322 = vector.broadcast %c2_i32_134 : i32 to vector<16x128xi32>
      %323 = arith.cmpi slt, %18, %322 : vector<16x128xi32>
      %c2050_i32_135 = arith.constant 2050 : i32
      %324 = vector.broadcast %c2050_i32_135 : i32 to vector<16x128xi32>
      %325 = arith.select %323, %324, %321 : vector<16x128xi1>, vector<16x128xi32>
      %c2_i32_136 = arith.constant 2 : i32
      %326 = tpu.dynamic_rotate %320 by %c2_i32_136 dim 0 : vector<16x128xi32>, i32 -> vector<16x128xi32>
      %c2_i32_137 = arith.constant 2 : i32
      %327 = vector.broadcast %c2_i32_137 : i32 to vector<16x128xi32>
      %328 = arith.cmpi slt, %18, %327 : vector<16x128xi32>
      %c0_i32_138 = arith.constant 0 : i32
      %329 = vector.broadcast %c0_i32_138 : i32 to vector<16x128xi32>
      %330 = arith.select %328, %329, %326 : vector<16x128xi1>, vector<16x128xi32>
      %c0_i32_139 = arith.constant 0 : i32
      %331 = vector.broadcast %c0_i32_139 : i32 to vector<16x128xi32>
      %332 = arith.cmpi sgt, %320, %331 : vector<16x128xi32>
      %333 = arith.minsi %319, %325 : vector<16x128xi32>
      %334 = arith.select %332, %319, %333 : vector<16x128xi1>, vector<16x128xi32>
      %335 = arith.maxsi %320, %330 : vector<16x128xi32>
      %c4_i32_140 = arith.constant 4 : i32
      %336 = tpu.dynamic_rotate %334 by %c4_i32_140 dim 0 : vector<16x128xi32>, i32 -> vector<16x128xi32>
      %c4_i32_141 = arith.constant 4 : i32
      %337 = vector.broadcast %c4_i32_141 : i32 to vector<16x128xi32>
      %338 = arith.cmpi slt, %18, %337 : vector<16x128xi32>
      %c2050_i32_142 = arith.constant 2050 : i32
      %339 = vector.broadcast %c2050_i32_142 : i32 to vector<16x128xi32>
      %340 = arith.select %338, %339, %336 : vector<16x128xi1>, vector<16x128xi32>
      %c4_i32_143 = arith.constant 4 : i32
      %341 = tpu.dynamic_rotate %335 by %c4_i32_143 dim 0 : vector<16x128xi32>, i32 -> vector<16x128xi32>
      %c4_i32_144 = arith.constant 4 : i32
      %342 = vector.broadcast %c4_i32_144 : i32 to vector<16x128xi32>
      %343 = arith.cmpi slt, %18, %342 : vector<16x128xi32>
      %c0_i32_145 = arith.constant 0 : i32
      %344 = vector.broadcast %c0_i32_145 : i32 to vector<16x128xi32>
      %345 = arith.select %343, %344, %341 : vector<16x128xi1>, vector<16x128xi32>
      %c0_i32_146 = arith.constant 0 : i32
      %346 = vector.broadcast %c0_i32_146 : i32 to vector<16x128xi32>
      %347 = arith.cmpi sgt, %335, %346 : vector<16x128xi32>
      %348 = arith.minsi %334, %340 : vector<16x128xi32>
      %349 = arith.select %347, %334, %348 : vector<16x128xi1>, vector<16x128xi32>
      %350 = arith.maxsi %335, %345 : vector<16x128xi32>
      %c8_i32_147 = arith.constant 8 : i32
      %351 = tpu.dynamic_rotate %349 by %c8_i32_147 dim 0 : vector<16x128xi32>, i32 -> vector<16x128xi32>
      %c8_i32_148 = arith.constant 8 : i32
      %352 = vector.broadcast %c8_i32_148 : i32 to vector<16x128xi32>
      %353 = arith.cmpi slt, %18, %352 : vector<16x128xi32>
      %c2050_i32_149 = arith.constant 2050 : i32
      %354 = vector.broadcast %c2050_i32_149 : i32 to vector<16x128xi32>
      %355 = arith.select %353, %354, %351 : vector<16x128xi1>, vector<16x128xi32>
      %c8_i32_150 = arith.constant 8 : i32
      %356 = tpu.dynamic_rotate %350 by %c8_i32_150 dim 0 : vector<16x128xi32>, i32 -> vector<16x128xi32>
      %c8_i32_151 = arith.constant 8 : i32
      %357 = vector.broadcast %c8_i32_151 : i32 to vector<16x128xi32>
      %358 = arith.cmpi slt, %18, %357 : vector<16x128xi32>
      %c0_i32_152 = arith.constant 0 : i32
      %359 = vector.broadcast %c0_i32_152 : i32 to vector<16x128xi32>
      %360 = arith.select %358, %359, %356 : vector<16x128xi1>, vector<16x128xi32>
      %c0_i32_153 = arith.constant 0 : i32
      %361 = vector.broadcast %c0_i32_153 : i32 to vector<16x128xi32>
      %362 = arith.cmpi sgt, %350, %361 : vector<16x128xi32>
      %363 = arith.minsi %349, %355 : vector<16x128xi32>
      %364 = arith.select %362, %349, %363 : vector<16x128xi1>, vector<16x128xi32>
      %365 = arith.maxsi %350, %360 : vector<16x128xi32>
      %c15_i32_154 = arith.constant 15 : i32
      %366 = tpu.dynamic_rotate %364 by %c15_i32_154 dim 0 : vector<16x128xi32>, i32 -> vector<16x128xi32>
      %c15_i32_155 = arith.constant 15 : i32
      %367 = vector.broadcast %c15_i32_155 : i32 to vector<16x128xi32>
      %368 = arith.cmpi sge, %18, %367 : vector<16x128xi32>
      %c2050_i32_156 = arith.constant 2050 : i32
      %369 = vector.broadcast %c2050_i32_156 : i32 to vector<16x128xi32>
      %370 = arith.select %368, %369, %366 : vector<16x128xi1>, vector<16x128xi32>
      %c15_i32_157 = arith.constant 15 : i32
      %371 = tpu.dynamic_rotate %32 by %c15_i32_157 dim 0 : vector<16x128xi32>, i32 -> vector<16x128xi32>
      %c15_i32_158 = arith.constant 15 : i32
      %372 = vector.broadcast %c15_i32_158 : i32 to vector<16x128xi32>
      %373 = arith.cmpi sge, %18, %372 : vector<16x128xi32>
      %c0_i32_159 = arith.constant 0 : i32
      %374 = vector.broadcast %c0_i32_159 : i32 to vector<16x128xi32>
      %375 = arith.select %373, %374, %371 : vector<16x128xi1>, vector<16x128xi32>
      %c0_i32_160 = arith.constant 0 : i32
      %376 = vector.broadcast %c0_i32_160 : i32 to vector<16x128xi32>
      %377 = arith.cmpi sgt, %32, %376 : vector<16x128xi32>
      %378 = arith.minsi %364, %370 : vector<16x128xi32>
      %379 = arith.select %377, %364, %378 : vector<16x128xi1>, vector<16x128xi32>
      %380 = arith.maxsi %32, %375 : vector<16x128xi32>
      %c14_i32 = arith.constant 14 : i32
      %381 = tpu.dynamic_rotate %379 by %c14_i32 dim 0 : vector<16x128xi32>, i32 -> vector<16x128xi32>
      %c14_i32_161 = arith.constant 14 : i32
      %382 = vector.broadcast %c14_i32_161 : i32 to vector<16x128xi32>
      %383 = arith.cmpi sge, %18, %382 : vector<16x128xi32>
      %c2050_i32_162 = arith.constant 2050 : i32
      %384 = vector.broadcast %c2050_i32_162 : i32 to vector<16x128xi32>
      %385 = arith.select %383, %384, %381 : vector<16x128xi1>, vector<16x128xi32>
      %c14_i32_163 = arith.constant 14 : i32
      %386 = tpu.dynamic_rotate %380 by %c14_i32_163 dim 0 : vector<16x128xi32>, i32 -> vector<16x128xi32>
      %c14_i32_164 = arith.constant 14 : i32
      %387 = vector.broadcast %c14_i32_164 : i32 to vector<16x128xi32>
      %388 = arith.cmpi sge, %18, %387 : vector<16x128xi32>
      %c0_i32_165 = arith.constant 0 : i32
      %389 = vector.broadcast %c0_i32_165 : i32 to vector<16x128xi32>
      %390 = arith.select %388, %389, %386 : vector<16x128xi1>, vector<16x128xi32>
      %c0_i32_166 = arith.constant 0 : i32
      %391 = vector.broadcast %c0_i32_166 : i32 to vector<16x128xi32>
      %392 = arith.cmpi sgt, %380, %391 : vector<16x128xi32>
      %393 = arith.minsi %379, %385 : vector<16x128xi32>
      %394 = arith.select %392, %379, %393 : vector<16x128xi1>, vector<16x128xi32>
      %395 = arith.maxsi %380, %390 : vector<16x128xi32>
      %c12_i32 = arith.constant 12 : i32
      %396 = tpu.dynamic_rotate %394 by %c12_i32 dim 0 : vector<16x128xi32>, i32 -> vector<16x128xi32>
      %c12_i32_167 = arith.constant 12 : i32
      %397 = vector.broadcast %c12_i32_167 : i32 to vector<16x128xi32>
      %398 = arith.cmpi sge, %18, %397 : vector<16x128xi32>
      %c2050_i32_168 = arith.constant 2050 : i32
      %399 = vector.broadcast %c2050_i32_168 : i32 to vector<16x128xi32>
      %400 = arith.select %398, %399, %396 : vector<16x128xi1>, vector<16x128xi32>
      %c12_i32_169 = arith.constant 12 : i32
      %401 = tpu.dynamic_rotate %395 by %c12_i32_169 dim 0 : vector<16x128xi32>, i32 -> vector<16x128xi32>
      %c12_i32_170 = arith.constant 12 : i32
      %402 = vector.broadcast %c12_i32_170 : i32 to vector<16x128xi32>
      %403 = arith.cmpi sge, %18, %402 : vector<16x128xi32>
      %c0_i32_171 = arith.constant 0 : i32
      %404 = vector.broadcast %c0_i32_171 : i32 to vector<16x128xi32>
      %405 = arith.select %403, %404, %401 : vector<16x128xi1>, vector<16x128xi32>
      %c0_i32_172 = arith.constant 0 : i32
      %406 = vector.broadcast %c0_i32_172 : i32 to vector<16x128xi32>
      %407 = arith.cmpi sgt, %395, %406 : vector<16x128xi32>
      %408 = arith.minsi %394, %400 : vector<16x128xi32>
      %409 = arith.select %407, %394, %408 : vector<16x128xi1>, vector<16x128xi32>
      %410 = arith.maxsi %395, %405 : vector<16x128xi32>
      %c8_i32_173 = arith.constant 8 : i32
      %411 = tpu.dynamic_rotate %409 by %c8_i32_173 dim 0 : vector<16x128xi32>, i32 -> vector<16x128xi32>
      %c8_i32_174 = arith.constant 8 : i32
      %412 = vector.broadcast %c8_i32_174 : i32 to vector<16x128xi32>
      %413 = arith.cmpi sge, %18, %412 : vector<16x128xi32>
      %c2050_i32_175 = arith.constant 2050 : i32
      %414 = vector.broadcast %c2050_i32_175 : i32 to vector<16x128xi32>
      %415 = arith.select %413, %414, %411 : vector<16x128xi1>, vector<16x128xi32>
      %c8_i32_176 = arith.constant 8 : i32
      %416 = tpu.dynamic_rotate %410 by %c8_i32_176 dim 0 : vector<16x128xi32>, i32 -> vector<16x128xi32>
      %c8_i32_177 = arith.constant 8 : i32
      %417 = vector.broadcast %c8_i32_177 : i32 to vector<16x128xi32>
      %418 = arith.cmpi sge, %18, %417 : vector<16x128xi32>
      %c0_i32_178 = arith.constant 0 : i32
      %419 = vector.broadcast %c0_i32_178 : i32 to vector<16x128xi32>
      %420 = arith.select %418, %419, %416 : vector<16x128xi1>, vector<16x128xi32>
      %c0_i32_179 = arith.constant 0 : i32
      %421 = vector.broadcast %c0_i32_179 : i32 to vector<16x128xi32>
      %422 = arith.cmpi sgt, %410, %421 : vector<16x128xi32>
      %423 = arith.minsi %409, %415 : vector<16x128xi32>
      %424 = arith.select %422, %409, %423 : vector<16x128xi1>, vector<16x128xi32>
      %425 = arith.maxsi %410, %420 : vector<16x128xi32>
      %426 = arith.subi %arg3, %424 : vector<16x128xi32>
      %427 = vector.shape_cast %426 : vector<16x128xi32> to vector<1x16x128xi32>
      %cst_180 = arith.constant dense<-2147483648> : vector<1xi32>
      %428 = vector.multi_reduction <maxsi>, %427, %cst_180 [1, 2] : vector<1x16x128xi32> to vector<1xi32>
      %429 = vector.shape_cast %428 : vector<1xi32> to vector<1x1x1xi32>
      %430 = vector.extract %429[0, 0, 0] : i32 from vector<1x1x1xi32>
      %c1_i32_181 = arith.constant 1 : i32
      %431 = arith.addi %arg5, %c1_i32_181 : i32
      scf.yield %424, %430, %431 : vector<16x128xi32>, i32, i32
    }
    %c0_i32_13 = arith.constant 0 : i32
    %34 = vector.broadcast %c0_i32_13 : i32 to vector<16x128xi32>
    %35 = arith.select %3, %33#0, %34 : vector<16x128xi1>, vector<16x128xi32>
    %c0_i32_14 = arith.constant 0 : i32
    %36 = vector.broadcast %c0_i32_14 : i32 to vector<16x128xi32>
    %37 = arith.cmpi slt, %35, %36 : vector<16x128xi32>
    %c2050_i32_15 = arith.constant 2050 : i32
    %38 = vector.broadcast %c2050_i32_15 : i32 to vector<16x128xi32>
    %39 = arith.addi %35, %38 : vector<16x128xi32>
    %c0_i32_16 = arith.constant 0 : i32
    %40 = vector.broadcast %c0_i32_16 : i32 to vector<16x128xi32>
    %41 = arith.select %37, %39, %40 : vector<16x128xi1>, vector<16x128xi32>
    %42 = arith.sitofp %41 : vector<16x128xi32> to vector<16x128xf32>
    %cst_17 = arith.constant dense<true> : vector<16x128xi1>
    %43 = arith.xori %37, %cst_17 : vector<16x128xi1>
    %44 = arith.andi %3, %43 : vector<16x128xi1>
    %c0_i32_18 = arith.constant 0 : i32
    %45 = vector.broadcast %c0_i32_18 : i32 to vector<16x128xi32>
    %46 = arith.select %44, %35, %45 : vector<16x128xi1>, vector<16x128xi32>
    %47 = arith.sitofp %46 : vector<16x128xi32> to vector<16x128xf32>
    %48 = arith.extui %17 : vector<16x128xi1> to vector<16x128xi32>
    %49 = arith.sitofp %48 : vector<16x128xi32> to vector<16x128xf32>
    %50 = vector.shape_cast %49 : vector<16x128xf32> to vector<1x16x128xf32>
    %cst_19 = arith.constant dense<0xFF800000> : vector<1xf32>
    %51 = vector.multi_reduction <maximumf>, %50, %cst_19 [1, 2] : vector<1x16x128xf32> to vector<1xf32>
    %52 = vector.shape_cast %51 : vector<1xf32> to vector<1x1x1xf32>
    %53 = vector.extract %52[0, 0, 0] : f32 from vector<1x1x1xf32>
    %54 = vector.broadcast %53 : f32 to vector<1x1xf32>
    %cst_20 = arith.constant 0.000000e+00 : f32
    %55 = vector.broadcast %cst_20 : f32 to vector<1x1xf32>
    %56 = arith.cmpf ogt, %54, %55 : vector<1x1xf32>
    %cst_21 = arith.constant 0.000000e+00 : f32
    %57 = vector.broadcast %cst_21 : f32 to vector<16x128xf32>
    %58 = vector.shape_cast %56 : vector<1x1xi1> to vector<1x1xi1>
    %59 = vector.broadcast %58 : vector<1x1xi1> to vector<16x128xi1>
    %60 = arith.select %59, %42, %57 : vector<16x128xi1>, vector<16x128xf32>
    %c0_22 = arith.constant 0 : index
    %c1 = arith.constant 1 : index
    %c0_23 = arith.constant 0 : index
    %c0_24 = arith.constant 0 : index
    %61 = vector.load %arg2[%c0_22, %c1, %c0_23, %c0_24] : memref<1x3x16x128xf32, #tpu.memory_space<vmem>>, vector<1x1x16x128xf32>
    %62 = vector.shape_cast %61 : vector<1x1x16x128xf32> to vector<16x128xf32>
    %63 = vector.shape_cast %60 : vector<16x128xf32> to vector<1x1x16x128xf32>
    tpu.vector_store %arg2[%c0_22, %c1, %c0_23, %c0_24], %63 {strides = array<i32>} : memref<1x3x16x128xf32, #tpu.memory_space<vmem>>, vector<1x1x16x128xf32>,
    %64 = vector.shape_cast %56 : vector<1x1xi1> to vector<1x1xi1>
    %65 = vector.broadcast %64 : vector<1x1xi1> to vector<16x128xi1>
    %66 = arith.select %65, %47, %5 : vector<16x128xi1>, vector<16x128xf32>
    %c0_25 = arith.constant 0 : index
    %c2 = arith.constant 2 : index
    %c0_26 = arith.constant 0 : index
    %c0_27 = arith.constant 0 : index
    %67 = vector.load %arg2[%c0_25, %c2, %c0_26, %c0_27] : memref<1x3x16x128xf32, #tpu.memory_space<vmem>>, vector<1x1x16x128xf32>
    %68 = vector.shape_cast %67 : vector<1x1x16x128xf32> to vector<16x128xf32>
    %69 = vector.shape_cast %66 : vector<16x128xf32> to vector<1x1x16x128xf32>
    tpu.vector_store %arg2[%c0_25, %c2, %c0_26, %c0_27], %69 {strides = array<i32>} : memref<1x3x16x128xf32, #tpu.memory_space<vmem>>, vector<1x1x16x128xf32>,
    return
  }
  func.func @transform_0(%arg0: i32) -> (i32, i32, i32) {
    %c0_i32 = arith.constant 0 : i32
    %c0_i32_0 = arith.constant 0 : i32
    %c0_i32_1 = arith.constant 0 : i32
    return %arg0, %c0_i32, %c0_i32_0 : i32, i32, i32
  }
  func.func @transform_1(%arg0: i32) -> (i32, i32, i32, i32) {
    %c0_i32 = arith.constant 0 : i32
    %c0_i32_0 = arith.constant 0 : i32
    %c0_i32_1 = arith.constant 0 : i32
    %c0_i32_2 = arith.constant 0 : i32
    return %arg0, %c0_i32, %c0_i32_0, %c0_i32_1 : i32, i32, i32, i32
  }
}

</mosaic_0001>

<llo_original>
// kernel: tpu_custom_call.1
$region0: #{tpu_custom_call.1}
  #allocation0 [shape = 'u32[]', space=smem, size = 0x4, offset = 0x4, fixed_abs, tag = 'smem constant byte address 0x4 - core index']
  #allocation1 [shape = 'u32[144,128]{1,0:T(1,128)}', space=vmem, size = 0x12000, scoped, tag = 'internal scratch']
  %s0 = inlined_call_operand.hbm [shape: f32[2,16,128], index: 0, kind: input, shape index: {}]
  %s1 = inlined_call_operand.hbm [shape: f32[2,3,16,128], index: 1, kind: output, shape index: {}]
  %s2 = sld [smem:[#allocation0]]
  $region48: #{tpu_custom_call.1} parent=0
    _
  %s4 = ssub.s32 1, %s2
  %s5 = scalar_select 0, %s4, %s2
  $region1: #{tpu_custom_call.1} parent=0
    #allocation2 [shape = 'u8[16384]{0}', space=vmem, size = 0x4000, scoped, tag = 'input window, operand 0']
    #allocation3 [shape = 's32[2]{0}', space=sflag, size = 0x8, scoped, tag = 'scoped memory for tpu_custom_call.1']
    #allocation4 [shape = 's32[2]{0}', space=sflag, size = 0x8, scoped, tag = 'scoped memory for tpu_custom_call.1']
    #allocation5 [shape = 'u8[49152]{0}', space=vmem, size = 0xc000, scoped, tag = 'output window, operand 0']
    %6 = vsyncpa [#allocation3], 0
    %s7 = scalar_lea.sflag [#allocation3], 1
    %8 = vsyncpa %s7, 0
    %9 = vsyncpa [#allocation4], 0
    %s10 = scalar_lea.sflag [#allocation4], 1
    %11 = vsyncpa %s10, 0
    loop: start=0, step=1, limit=4
    $region2: #{tpu_custom_call.1} parent=1 // loop_pre_header
      _
    $region3: #{tpu_custom_call.1} parent=1 // loop_header
      %s13 = sphi 0, %s17
      %p14 = scmp.ge.s32.totalorder %s13, 4
      %s23 = sphi 0, %s25
      %s26 = sphi 0, %s23
      %s27 = sphi 0, %s26
      %s43 = sphi 0, %s27
      %s49 = sphi 0, %s51
      %s52 = sphi 0, %s49
      %s53 = sphi 0, %s52
      %s69 = sphi 0, %s53
    $region4: #{tpu_custom_call.1} parent=1 // loop_header_branch
      %16 = sbr.rel (%p14) target = $region8
    $region5: #{tpu_custom_call.1} parent=1 // loop_body
      %s18 = ssub.s32 %s13, 1
      %s19 = ssub.s32 %s13, 2
      %s20 = sadd.s32 %s13, 1
      %s21 = ssub.s32 %s13, %s20
      %p22 = scmp.eq.s32.totalorder %s21, 0
      %s24 = sadd.s32 %s23, 1
      %s25 = scalar_select %p22, %s23, %s24
      %p28 = pneg %p22
      %p29 = scmp.eq.s32.totalorder %s13, 1
      %p30 = por %p28, %p29
      %p31 = scmp.ne.s32.totalorder %s23, %s26
      %p32 = scmp.eq.s32.totalorder %s13, 0
      %p33 = por %p31, %p32
      %p34 = scmp.ne.s32.totalorder %s23, %s26
      %p35 = scmp.eq.s32.totalorder %s18, 1
      %p36 = por %p34, %p35
      %p37 = scmp.ne.s32.totalorder %s26, %s27
      %p38 = scmp.eq.s32.totalorder %s18, 0
      %p39 = por %p37, %p38
      %p40 = scmp.ne.s32.totalorder %s26, %s27
      %p41 = scmp.eq.s32.totalorder %s19, 1
      %p42 = por %p40, %p41
      %p44 = scmp.ne.s32.totalorder %s27, %s43
      %p45 = scmp.eq.s32.totalorder %s19, 0
      %p46 = por %p44, %p45
      %s47 = ssub.s32 %s13, %s20
      %p48 = scmp.eq.s32.totalorder %s47, 0
      %s50 = sadd.s32 %s49, 1
      %s51 = scalar_select %p48, %s49, %s50
      %p54 = pneg %p48
      %p55 = scmp.eq.s32.totalorder %s13, 1
      %p56 = por %p54, %p55
      %p57 = scmp.ne.s32.totalorder %s49, %s52
      %p58 = scmp.eq.s32.totalorder %s13, 0
      %p59 = por %p57, %p58
      %p60 = scmp.ne.s32.totalorder %s49, %s52
      %p61 = scmp.eq.s32.totalorder %s18, 1
      %p62 = por %p60, %p61
      %p63 = scmp.ne.s32.totalorder %s52, %s53
      %p64 = scmp.eq.s32.totalorder %s18, 0
      %p65 = por %p63, %p64
      %p66 = scmp.ne.s32.totalorder %s52, %s53
      %p67 = scmp.eq.s32.totalorder %s19, 1
      %p68 = por %p66, %p67
      %p70 = scmp.ne.s32.totalorder %s53, %s69
      %p71 = scmp.eq.s32.totalorder %s19, 0
      %p72 = por %p70, %p71
      %p73 = scmp.le.s32.totalorder 1, %s13
      %p74 = scmp.lt.s32.totalorder %s13, 3
      %p75 = pnand %p73, %p74
      %p76 = pneg %p75
      // Predicated region
      $region9: #{tpu_custom_call.1} parent=5 // pred_check
        _
      $region10: #{tpu_custom_call.1} parent=5 // pred_check_branch
        %78 = sbr.rel (%p75) target = $region12
      $region11: #{tpu_custom_call.1} parent=5 // pred_region
        %s79 = ssub.s32 %s13, 1
      $region12: #{tpu_custom_call.1} parent=5 // pred_fallthru
        _
      %p80 = scmp.lt.s32.totalorder %s13, 2
      // Predicated region
      $region13: #{tpu_custom_call.1} parent=5 // pred_check
        %p81 = pneg %p80
      $region14: #{tpu_custom_call.1} parent=5 // pred_check_branch
        %83 = sbr.rel (%p81) target = $region16
      $region15: #{tpu_custom_call.1} parent=5 // pred_region
        // Predicated region
        $region17: #{tpu_custom_call.1} parent=15 // pred_check
          %p84 = pneg %p33
        $region18: #{tpu_custom_call.1} parent=15 // pred_check_branch
          %86 = sbr.rel (%p84) target = $region20
        $region19: #{tpu_custom_call.1} parent=15 // pred_region
          %s87 = sand.u32 %s23, 1
          %s88 = scalar_lea.sflag [#allocation3], %s87
          %s89 = sand.u32 %s23, 1
          %s90 = smul.addr %s89, 16
          %s91 = scalar_lea.vmem [#allocation2], %s90
          %s93 = ssub.s32 256, 256
          %94 = vsyncadd %s88, %s93
          %s95 = smul.addr %s13, 2
          %s96 = smul.addr %s95, 128
          %s97 = scalar_lea.hbm %s0, %s96
          %s98 = sshll.u32 %s91, 4
          %s99 = int_to_ptr.vmem [resolvable:$true] %s98
          %104 = dma.hbm_to_vmem [thread:$0]  %s97, 256, %s99, %s88, 128, 128, 8
        $region20: #{tpu_custom_call.1} parent=15 // pred_fallthru
          _
      $region16: #{tpu_custom_call.1} parent=5 // pred_fallthru
        _
      %p105 = scmp.le.s32.totalorder 1, %s13
      %p106 = scmp.lt.s32.totalorder %s13, 3
      %p107 = pnand %p105, %p106
      %p108 = pneg %p107
      // Predicated region
      $region21: #{tpu_custom_call.1} parent=5 // pred_check
        _
      $region22: #{tpu_custom_call.1} parent=5 // pred_check_branch
        %110 = sbr.rel (%p107) target = $region24
      $region23: #{tpu_custom_call.1} parent=5 // pred_region
        %s111 = ssub.s32 %s13, 1
        %s112 = sand.u32 %s26, 1
        %s113 = scalar_lea.sflag [#allocation3], %s112
        %s114 = sand.u32 %s26, 1
        %s115 = smul.addr %s114, 16
        %s116 = scalar_lea.vmem [#allocation2], %s115
        // Predicated region
        $region25: #{tpu_custom_call.1} parent=23 // pred_check
          %p117 = pneg %p39
        $region26: #{tpu_custom_call.1} parent=23 // pred_check_branch
          %119 = sbr.rel (%p117) target = $region28
        $region27: #{tpu_custom_call.1} parent=23 // pred_region
          %120 = dma.done %s113, 256
        $region28: #{tpu_custom_call.1} parent=23 // pred_fallthru
          _
        %s121 = sand.u32 %s26, 1
        %s122 = scalar_lea.sflag [#allocation3], %s121
        %s123 = sand.u32 %s26, 1
        %s124 = smul.addr %s123, 16
        %s125 = scalar_lea.vmem [#allocation2], %s124
        %p126 = pneg %p39
        %p127 = pneg %p36
        %p128 = pneg %p65
        %p129 = pneg %p62
        %s130 = sand.u32 %s52, 1
        %s131 = scalar_lea.sflag [#allocation4], %s130
        %s132 = sand.u32 %s52, 1
        %s133 = smul.addr %s132, 48
        %s134 = scalar_lea.vmem [#allocation5], %s133
        %v135 = vld [vmem:[%s116] sm:$0xff]
        %v136 = vld [vmem:[%s116 + $0x8] sm:$0xff]
        %vm137 = vcmp.gt.f32.partialorder %v135, 0.2
        %vm138 = vcmp.gt.f32.partialorder %v136, 0.2
        %v139 = vsel %vm137, 1, 0
        %v140 = vsel %vm138, 1, 0
        %v141 = vcvt.s32.f32 %v139
        %v142 = vcvt.s32.f32 %v140
        %v143 = vsub.f32 1.0, %v141
        %v144 = vsub.f32 1.0, %v142
        %145 = vst [vmem:[%s134] sm:$0xff] %v143
        %146 = vst [vmem:[%s134 + $0x8] sm:$0xff] %v144
        %147 = vadd.xlane.f32.xlu0 %v141
        %v148 = vpop.xlane.xlu0 %147
        %149 = vadd.xlane.f32.xlu0 %v142
        %v150 = vpop.xlane.xlu0 %149
        %vm151 = vcmp.ge.f32.partialorder %v148, 8.0
        %vm152 = vcmp.ge.f32.partialorder %v150, 8.0
        %v153 = vsel %vm151, 1, 0
        %v154 = vsel %vm152, 1, 0
        %vm155 = vcmp.eq.s32.totalorder %v153, 1
        %vm156 = vcmp.eq.s32.totalorder %v154, 1
        %vm157 = vmand %vm137, %vm155
        %vm158 = vmand %vm138, %vm156
        %v159 = vlaneseq
        %v160 = vshrl.u32 %v159, 7
        %v161 = vadd.s32 %v160, 8
        %v162 = vlaneseq
        %v163 = vand.u32 %v162, 127
        %v164 = vmul.u32 %v160, 128
        %v165 = vmul.u32 %v161, 128
        %v166 = vadd.s32 %v164, %v163
        %v167 = vadd.s32 %v165, %v163
        %v168 = vadd.s32 %v166, 1
        %v169 = vadd.s32 %v167, 1
        %v170 = vsub.s32 %v168, 2050
        %v171 = vsub.s32 %v169, 2050
        %v172 = vsel %vm157, %v170, %v168
        %v173 = vsel %vm158, %v171, %v169
        %v174 = vsel %vm137, %v172, 2050
        %v175 = vsel %vm138, %v173, 2050
        %v176 = vsel %vm137, 0, 1
        %v177 = vsel %vm138, 0, 1
        // While loop
        $region29: #{tpu_custom_call.1} parent=23 // loop_pre_header
          _
        $region30: #{tpu_custom_call.1} parent=23 // loop_header
          %v179 = vphi %v174, %v735
          %v180 = vphi %v175, %v736
          %s181 = sphi 1, %s764
          %s182 = sphi 0, %s765
          %p183 = scmp.gt.s32.totalorder %s181, 0
          %p184 = scmp.lt.s32.totalorder %s182, 2048
          %p185 = pnand %p183, %p184
          %p186 = pneg %p185
        $region31: #{tpu_custom_call.1} parent=23 // loop_header_branch
          %188 = sbr.rel (%p185) target = $region35
        $region32: #{tpu_custom_call.1} parent=23 // loop_body
          %v189 = vrot.slane %v179, 7
          %v190 = vrot.slane %v180, 7
          %vm191 = vcmp.lt.s32.totalorder %v160, 1
          %v192 = vsel %vm191, %v189, %v190
          %v193 = vsel %vm191, %v190, %v189
          %vm194 = vcmp.lt.s32.totalorder %v161, 1
          %v195 = vsel %vm191, 2050, %v193
          %v196 = vsel %vm194, 2050, %v192
          %v197 = vrot.slane %v179, 1
          %v198 = vrot.slane %v180, 1
          %vm199 = vcmp.lt.s32.totalorder %v160, 7
          %v200 = vsel %vm199, %v197, %v198
          %v201 = vsel %vm199, %v198, %v197
          %vm202 = vcmp.ge.s32.totalorder %v160, 15
          %vm203 = vcmp.ge.s32.totalorder %v161, 15
          %v204 = vsel %vm202, 2050, %v200
          %v205 = vsel %vm203, 2050, %v201
          %vm206 = vcmp.lt.s32.totalorder %v195, %v204
          %v207 = vsel %vm206, %v195, %v204
          %vm208 = vcmp.lt.s32.totalorder %v196, %v205
          %v209 = vsel %vm208, %v196, %v205
          %vm210 = vcmp.lt.s32.totalorder %v207, %v179
          %v211 = vsel %vm210, %v207, %v179
          %vm212 = vcmp.lt.s32.totalorder %v209, %v180
          %v213 = vsel %vm212, %v209, %v180
          %214 = vrot.lane.b32.xlu0 %v211, 1
          %v215 = vpop.permute.xlu0 %214
          %216 = vrot.lane.b32.xlu0 %v213, 1
          %v217 = vpop.permute.xlu0 %216
          %vm218 = vcmp.lt.s32.totalorder %v163, 1
          %v219 = vsel %vm218, 2050, %v215
          %v220 = vsel %vm218, 2050, %v217
          %221 = vrot.lane.b32.xlu0 %v211, 127
          %v222 = vpop.permute.xlu0 %221
          %223 = vrot.lane.b32.xlu0 %v213, 127
          %v224 = vpop.permute.xlu0 %223
          %vm225 = vcmp.ge.s32.totalorder %v163, 127
          %v226 = vsel %vm225, 2050, %v222
          %v227 = vsel %vm225, 2050, %v224
          %vm228 = vcmp.lt.s32.totalorder %v219, %v226
          %v229 = vsel %vm228, %v219, %v226
          %vm230 = vcmp.lt.s32.totalorder %v220, %v227
          %v231 = vsel %vm230, %v220, %v227
          %vm232 = vcmp.lt.s32.totalorder %v229, %v211
          %v233 = vsel %vm232, %v229, %v211
          %vm234 = vcmp.lt.s32.totalorder %v231, %v213
          %v235 = vsel %vm234, %v231, %v213
          %v236 = vsel %vm137, %v233, 2050
          %v237 = vsel %vm138, %v235, 2050
          %238 = vrot.lane.b32.xlu0 %v236, 1
          %v239 = vpop.permute.xlu0 %238
          %240 = vrot.lane.b32.xlu0 %v237, 1
          %v241 = vpop.permute.xlu0 %240
          %v242 = vsel %vm218, 2050, %v239
          %v243 = vsel %vm218, 2050, %v241
          %244 = vrot.lane.b32.xlu0 %v176, 1
          %v245 = vpop.permute.xlu0 %244
          %246 = vrot.lane.b32.xlu0 %v177, 1
          %v247 = vpop.permute.xlu0 %246
          %v248 = vsel %vm218, 0, %v245
          %v249 = vsel %vm218, 0, %v247
          %vm250 = vcmp.gt.s32.totalorder %v176, 0
          %vm251 = vcmp.gt.s32.totalorder %v177, 0
          %vm252 = vcmp.lt.s32.totalorder %v236, %v242
          %v253 = vsel %vm252, %v236, %v242
          %vm254 = vcmp.lt.s32.totalorder %v237, %v243
          %v255 = vsel %vm254, %v237, %v243
          %v256 = vsel %vm250, %v236, %v253
          %v257 = vsel %vm251, %v237, %v255
          %vm258 = vcmp.gt.s32.totalorder %v176, %v248
          %v259 = vsel %vm258, %v176, %v248
          %vm260 = vcmp.gt.s32.totalorder %v177, %v249
          %v261 = vsel %vm260, %v177, %v249
          %262 = vrot.lane.b32.xlu0 %v256, 2
          %v263 = vpop.permute.xlu0 %262
          %264 = vrot.lane.b32.xlu0 %v257, 2
          %v265 = vpop.permute.xlu0 %264
          %vm266 = vcmp.lt.s32.totalorder %v163, 2
          %v267 = vsel %vm266, 2050, %v263
          %v268 = vsel %vm266, 2050, %v265
          %269 = vrot.lane.b32.xlu0 %v259, 2
          %v270 = vpop.permute.xlu0 %269
          %271 = vrot.lane.b32.xlu0 %v261, 2
          %v272 = vpop.permute.xlu0 %271
          %v273 = vsel %vm266, 0, %v270
          %v274 = vsel %vm266, 0, %v272
          %vm275 = vcmp.gt.s32.totalorder %v259, 0
          %vm276 = vcmp.gt.s32.totalorder %v261, 0
          %vm277 = vcmp.lt.s32.totalorder %v256, %v267
          %v278 = vsel %vm277, %v256, %v267
          %vm279 = vcmp.lt.s32.totalorder %v257, %v268
          %v280 = vsel %vm279, %v257, %v268
          %v281 = vsel %vm275, %v256, %v278
          %v282 = vsel %vm276, %v257, %v280
          %vm283 = vcmp.gt.s32.totalorder %v259, %v273
          %v284 = vsel %vm283, %v259, %v273
          %vm285 = vcmp.gt.s32.totalorder %v261, %v274
          %v286 = vsel %vm285, %v261, %v274
          %287 = vrot.lane.b32.xlu0 %v281, 4
          %v288 = vpop.permute.xlu0 %287
          %289 = vrot.lane.b32.xlu0 %v282, 4
          %v290 = vpop.permute.xlu0 %289
          %vm291 = vcmp.lt.s32.totalorder %v163, 4
          %v292 = vsel %vm291, 2050, %v288
          %v293 = vsel %vm291, 2050, %v290
          %294 = vrot.lane.b32.xlu0 %v284, 4
          %v295 = vpop.permute.xlu0 %294
          %296 = vrot.lane.b32.xlu0 %v286, 4
          %v297 = vpop.permute.xlu0 %296
          %v298 = vsel %vm291, 0, %v295
          %v299 = vsel %vm291, 0, %v297
          %vm300 = vcmp.gt.s32.totalorder %v284, 0
          %vm301 = vcmp.gt.s32.totalorder %v286, 0
          %vm302 = vcmp.lt.s32.totalorder %v281, %v292
          %v303 = vsel %vm302, %v281, %v292
          %vm304 = vcmp.lt.s32.totalorder %v282, %v293
          %v305 = vsel %vm304, %v282, %v293
          %v306 = vsel %vm300, %v281, %v303
          %v307 = vsel %vm301, %v282, %v305
          %vm308 = vcmp.gt.s32.totalorder %v284, %v298
          %v309 = vsel %vm308, %v284, %v298
          %vm310 = vcmp.gt.s32.totalorder %v286, %v299
          %v311 = vsel %vm310, %v286, %v299
          %312 = vrot.lane.b32.xlu0 %v306, 8
          %v313 = vpop.permute.xlu0 %312
          %314 = vrot.lane.b32.xlu0 %v307, 8
          %v315 = vpop.permute.xlu0 %314
          %vm316 = vcmp.lt.s32.totalorder %v163, 8
          %v317 = vsel %vm316, 2050, %v313
          %v318 = vsel %vm316, 2050, %v315
          %319 = vrot.lane.b32.xlu0 %v309, 8
          %v320 = vpop.permute.xlu0 %319
          %321 = vrot.lane.b32.xlu0 %v311, 8
          %v322 = vpop.permute.xlu0 %321
          %v323 = vsel %vm316, 0, %v320
          %v324 = vsel %vm316, 0, %v322
          %vm325 = vcmp.gt.s32.totalorder %v309, 0
          %vm326 = vcmp.gt.s32.totalorder %v311, 0
          %vm327 = vcmp.lt.s32.totalorder %v306, %v317
          %v328 = vsel %vm327, %v306, %v317
          %vm329 = vcmp.lt.s32.totalorder %v307, %v318
          %v330 = vsel %vm329, %v307, %v318
          %v331 = vsel %vm325, %v306, %v328
          %v332 = vsel %vm326, %v307, %v330
          %vm333 = vcmp.gt.s32.totalorder %v309, %v323
          %v334 = vsel %vm333, %v309, %v323
          %vm335 = vcmp.gt.s32.totalorder %v311, %v324
          %v336 = vsel %vm335, %v311, %v324
          %337 = vrot.lane.b32.xlu0 %v331, 16
          %v338 = vpop.permute.xlu0 %337
          %339 = vrot.lane.b32.xlu0 %v332, 16
          %v340 = vpop.permute.xlu0 %339
          %vm341 = vcmp.lt.s32.totalorder %v163, 16
          %v342 = vsel %vm341, 2050, %v338
          %v343 = vsel %vm341, 2050, %v340
          %344 = vrot.lane.b32.xlu0 %v334, 16
          %v345 = vpop.permute.xlu0 %344
          %346 = vrot.lane.b32.xlu0 %v336, 16
          %v347 = vpop.permute.xlu0 %346
          %v348 = vsel %vm341, 0, %v345
          %v349 = vsel %vm341, 0, %v347
          %vm350 = vcmp.gt.s32.totalorder %v334, 0
          %vm351 = vcmp.gt.s32.totalorder %v336, 0
          %vm352 = vcmp.lt.s32.totalorder %v331, %v342
          %v353 = vsel %vm352, %v331, %v342
          %vm354 = vcmp.lt.s32.totalorder %v332, %v343
          %v355 = vsel %vm354, %v332, %v343
          %v356 = vsel %vm350, %v331, %v353
          %v357 = vsel %vm351, %v332, %v355
          %vm358 = vcmp.gt.s32.totalorder %v334, %v348
          %v359 = vsel %vm358, %v334, %v348
          %vm360 = vcmp.gt.s32.totalorder %v336, %v349
          %v361 = vsel %vm360, %v336, %v349
          %362 = vrot.lane.b32.xlu0 %v356, 32
          %v363 = vpop.permute.xlu0 %362
          %364 = vrot.lane.b32.xlu0 %v357, 32
          %v365 = vpop.permute.xlu0 %364
          %vm366 = vcmp.lt.s32.totalorder %v163, 32
          %v367 = vsel %vm366, 2050, %v363
          %v368 = vsel %vm366, 2050, %v365
          %369 = vrot.lane.b32.xlu0 %v359, 32
          %v370 = vpop.permute.xlu0 %369
          %371 = vrot.lane.b32.xlu0 %v361, 32
          %v372 = vpop.permute.xlu0 %371
          %v373 = vsel %vm366, 0, %v370
          %v374 = vsel %vm366, 0, %v372
          %vm375 = vcmp.gt.s32.totalorder %v359, 0
          %vm376 = vcmp.gt.s32.totalorder %v361, 0
          %vm377 = vcmp.lt.s32.totalorder %v356, %v367
          %v378 = vsel %vm377, %v356, %v367
          %vm379 = vcmp.lt.s32.totalorder %v357, %v368
          %v380 = vsel %vm379, %v357, %v368
          %v381 = vsel %vm375, %v356, %v378
          %v382 = vsel %vm376, %v357, %v380
          %vm383 = vcmp.gt.s32.totalorder %v359, %v373
          %v384 = vsel %vm383, %v359, %v373
          %vm385 = vcmp.gt.s32.totalorder %v361, %v374
          %v386 = vsel %vm385, %v361, %v374
          %387 = vrot.lane.b32.xlu0 %v381, 64
          %v388 = vpop.permute.xlu0 %387
          %389 = vrot.lane.b32.xlu0 %v382, 64
          %v390 = vpop.permute.xlu0 %389
          %vm391 = vcmp.lt.s32.totalorder %v163, 64
          %v392 = vsel %vm391, 2050, %v388
          %v393 = vsel %vm391, 2050, %v390
          %vm394 = vcmp.gt.s32.totalorder %v384, 0
          %vm395 = vcmp.gt.s32.totalorder %v386, 0
          %vm396 = vcmp.lt.s32.totalorder %v381, %v392
          %v397 = vsel %vm396, %v381, %v392
          %vm398 = vcmp.lt.s32.totalorder %v382, %v393
          %v399 = vsel %vm398, %v382, %v393
          %v400 = vsel %vm394, %v381, %v397
          %v401 = vsel %vm395, %v382, %v399
          %402 = vrot.lane.b32.xlu0 %v400, 127
          %v403 = vpop.permute.xlu0 %402
          %404 = vrot.lane.b32.xlu0 %v401, 127
          %v405 = vpop.permute.xlu0 %404
          %v406 = vsel %vm225, 2050, %v403
          %v407 = vsel %vm225, 2050, %v405
          %408 = vrot.lane.b32.xlu0 %v176, 127
          %v409 = vpop.permute.xlu0 %408
          %410 = vrot.lane.b32.xlu0 %v177, 127
          %v411 = vpop.permute.xlu0 %410
          %v412 = vsel %vm225, 0, %v409
          %v413 = vsel %vm225, 0, %v411
          %vm414 = vcmp.lt.s32.totalorder %v400, %v406
          %v415 = vsel %vm414, %v400, %v406
          %vm416 = vcmp.lt.s32.totalorder %v401, %v407
          %v417 = vsel %vm416, %v401, %v407
          %v418 = vsel %vm250, %v400, %v415
          %v419 = vsel %vm251, %v401, %v417
          %vm420 = vcmp.gt.s32.totalorder %v176, %v412
          %v421 = vsel %vm420, %v176, %v412
          %vm422 = vcmp.gt.s32.totalorder %v177, %v413
          %v423 = vsel %vm422, %v177, %v413
          %424 = vrot.lane.b32.xlu0 %v418, 126
          %v425 = vpop.permute.xlu0 %424
          %426 = vrot.lane.b32.xlu0 %v419, 126
          %v427 = vpop.permute.xlu0 %426
          %vm428 = vcmp.ge.s32.totalorder %v163, 126
          %v429 = vsel %vm428, 2050, %v425
          %v430 = vsel %vm428, 2050, %v427
          %431 = vrot.lane.b32.xlu0 %v421, 126
          %v432 = vpop.permute.xlu0 %431
          %433 = vrot.lane.b32.xlu0 %v423, 126
          %v434 = vpop.permute.xlu0 %433
          %v435 = vsel %vm428, 0, %v432
          %v436 = vsel %vm428, 0, %v434
          %vm437 = vcmp.gt.s32.totalorder %v421, 0
          %vm438 = vcmp.gt.s32.totalorder %v423, 0
          %vm439 = vcmp.lt.s32.totalorder %v418, %v429
          %v440 = vsel %vm439, %v418, %v429
          %vm441 = vcmp.lt.s32.totalorder %v419, %v430
          %v442 = vsel %vm441, %v419, %v430
          %v443 = vsel %vm437, %v418, %v440
          %v444 = vsel %vm438, %v419, %v442
          %vm445 = vcmp.gt.s32.totalorder %v421, %v435
          %v446 = vsel %vm445, %v421, %v435
          %vm447 = vcmp.gt.s32.totalorder %v423, %v436
          %v448 = vsel %vm447, %v423, %v436
          %449 = vrot.lane.b32.xlu0 %v443, 124
          %v450 = vpop.permute.xlu0 %449
          %451 = vrot.lane.b32.xlu0 %v444, 124
          %v452 = vpop.permute.xlu0 %451
          %vm453 = vcmp.ge.s32.totalorder %v163, 124
          %v454 = vsel %vm453, 2050, %v450
          %v455 = vsel %vm453, 2050, %v452
          %456 = vrot.lane.b32.xlu0 %v446, 124
          %v457 = vpop.permute.xlu0 %456
          %458 = vrot.lane.b32.xlu0 %v448, 124
          %v459 = vpop.permute.xlu0 %458
          %v460 = vsel %vm453, 0, %v457
          %v461 = vsel %vm453, 0, %v459
          %vm462 = vcmp.gt.s32.totalorder %v446, 0
          %vm463 = vcmp.gt.s32.totalorder %v448, 0
          %vm464 = vcmp.lt.s32.totalorder %v443, %v454
          %v465 = vsel %vm464, %v443, %v454
          %vm466 = vcmp.lt.s32.totalorder %v444, %v455
          %v467 = vsel %vm466, %v444, %v455
          %v468 = vsel %vm462, %v443, %v465
          %v469 = vsel %vm463, %v444, %v467
          %vm470 = vcmp.gt.s32.totalorder %v446, %v460
          %v471 = vsel %vm470, %v446, %v460
          %vm472 = vcmp.gt.s32.totalorder %v448, %v461
          %v473 = vsel %vm472, %v448, %v461
          %474 = vrot.lane.b32.xlu0 %v468, 120
          %v475 = vpop.permute.xlu0 %474
          %476 = vrot.lane.b32.xlu0 %v469, 120
          %v477 = vpop.permute.xlu0 %476
          %vm478 = vcmp.ge.s32.totalorder %v163, 120
          %v479 = vsel %vm478, 2050, %v475
          %v480 = vsel %vm478, 2050, %v477
          %481 = vrot.lane.b32.xlu0 %v471, 120
          %v482 = vpop.permute.xlu0 %481
          %483 = vrot.lane.b32.xlu0 %v473, 120
          %v484 = vpop.permute.xlu0 %483
          %v485 = vsel %vm478, 0, %v482
          %v486 = vsel %vm478, 0, %v484
          %vm487 = vcmp.gt.s32.totalorder %v471, 0
          %vm488 = vcmp.gt.s32.totalorder %v473, 0
          %vm489 = vcmp.lt.s32.totalorder %v468, %v479
          %v490 = vsel %vm489, %v468, %v479
          %vm491 = vcmp.lt.s32.totalorder %v469, %v480
          %v492 = vsel %vm491, %v469, %v480
          %v493 = vsel %vm487, %v468, %v490
          %v494 = vsel %vm488, %v469, %v492
          %vm495 = vcmp.gt.s32.totalorder %v471, %v485
          %v496 = vsel %vm495, %v471, %v485
          %vm497 = vcmp.gt.s32.totalorder %v473, %v486
          %v498 = vsel %vm497, %v473, %v486
          %499 = vrot.lane.b32.xlu0 %v493, 112
          %v500 = vpop.permute.xlu0 %499
          %501 = vrot.lane.b32.xlu0 %v494, 112
          %v502 = vpop.permute.xlu0 %501
          %vm503 = vcmp.ge.s32.totalorder %v163, 112
          %v504 = vsel %vm503, 2050, %v500
          %v505 = vsel %vm503, 2050, %v502
          %506 = vrot.lane.b32.xlu0 %v496, 112
          %v507 = vpop.permute.xlu0 %506
          %508 = vrot.lane.b32.xlu0 %v498, 112
          %v509 = vpop.permute.xlu0 %508
          %v510 = vsel %vm503, 0, %v507
          %v511 = vsel %vm503, 0, %v509
          %vm512 = vcmp.gt.s32.totalorder %v496, 0
          %vm513 = vcmp.gt.s32.totalorder %v498, 0
          %vm514 = vcmp.lt.s32.totalorder %v493, %v504
          %v515 = vsel %vm514, %v493, %v504
          %vm516 = vcmp.lt.s32.totalorder %v494, %v505
          %v517 = vsel %vm516, %v494, %v505
          %v518 = vsel %vm512, %v493, %v515
          %v519 = vsel %vm513, %v494, %v517
          %vm520 = vcmp.gt.s32.totalorder %v496, %v510
          %v521 = vsel %vm520, %v496, %v510
          %vm522 = vcmp.gt.s32.totalorder %v498, %v511
          %v523 = vsel %vm522, %v498, %v511
          %524 = vrot.lane.b32.xlu0 %v518, 96
          %v525 = vpop.permute.xlu0 %524
          %526 = vrot.lane.b32.xlu0 %v519, 96
          %v527 = vpop.permute.xlu0 %526
          %vm528 = vcmp.ge.s32.totalorder %v163, 96
          %v529 = vsel %vm528, 2050, %v525
          %v530 = vsel %vm528, 2050, %v527
          %531 = vrot.lane.b32.xlu0 %v521, 96
          %v532 = vpop.permute.xlu0 %531
          %533 = vrot.lane.b32.xlu0 %v523, 96
          %v534 = vpop.permute.xlu0 %533
          %v535 = vsel %vm528, 0, %v532
          %v536 = vsel %vm528, 0, %v534
          %vm537 = vcmp.gt.s32.totalorder %v521, 0
          %vm538 = vcmp.gt.s32.totalorder %v523, 0
          %vm539 = vcmp.lt.s32.totalorder %v518, %v529
          %v540 = vsel %vm539, %v518, %v529
          %vm541 = vcmp.lt.s32.totalorder %v519, %v530
          %v542 = vsel %vm541, %v519, %v530
          %v543 = vsel %vm537, %v518, %v540
          %v544 = vsel %vm538, %v519, %v542
          %vm545 = vcmp.gt.s32.totalorder %v521, %v535
          %v546 = vsel %vm545, %v521, %v535
          %vm547 = vcmp.gt.s32.totalorder %v523, %v536
          %v548 = vsel %vm547, %v523, %v536
          %549 = vrot.lane.b32.xlu0 %v543, 64
          %v550 = vpop.permute.xlu0 %549
          %551 = vrot.lane.b32.xlu0 %v544, 64
          %v552 = vpop.permute.xlu0 %551
          %vm553 = vcmp.ge.s32.totalorder %v163, 64
          %v554 = vsel %vm553, 2050, %v550
          %v555 = vsel %vm553, 2050, %v552
          %vm556 = vcmp.gt.s32.totalorder %v546, 0
          %vm557 = vcmp.gt.s32.totalorder %v548, 0
          %vm558 = vcmp.lt.s32.totalorder %v543, %v554
          %v559 = vsel %vm558, %v543, %v554
          %vm560 = vcmp.lt.s32.totalorder %v544, %v555
          %v561 = vsel %vm560, %v544, %v555
          %v562 = vsel %vm556, %v543, %v559
          %v563 = vsel %vm557, %v544, %v561
          %v564 = vrot.slane %v562, 7
          %v565 = vrot.slane %v563, 7
          %v566 = vsel %vm191, %v564, %v565
          %v567 = vsel %vm191, %v565, %v564
          %v568 = vsel %vm191, 2050, %v567
          %v569 = vsel %vm194, 2050, %v566
          %v570 = vrot.slane %v176, 7
          %v571 = vrot.slane %v177, 7
          %v572 = vsel %vm191, %v570, %v571
          %v573 = vsel %vm191, %v571, %v570
          %v574 = vsel %vm191, 0, %v573
          %v575 = vsel %vm194, 0, %v572
          %vm576 = vcmp.lt.s32.totalorder %v562, %v568
          %v577 = vsel %vm576, %v562, %v568
          %vm578 = vcmp.lt.s32.totalorder %v563, %v569
          %v579 = vsel %vm578, %v563, %v569
          %v580 = vsel %vm250, %v562, %v577
          %v581 = vsel %vm251, %v563, %v579
          %vm582 = vcmp.gt.s32.totalorder %v176, %v574
          %v583 = vsel %vm582, %v176, %v574
          %vm584 = vcmp.gt.s32.totalorder %v177, %v575
          %v585 = vsel %vm584, %v177, %v575
          %v586 = vrot.slane %v580, 6
          %v587 = vrot.slane %v581, 6
          %vm588 = vcmp.lt.s32.totalorder %v160, 2
          %v589 = vsel %vm588, %v586, %v587
          %v590 = vsel %vm588, %v587, %v586
          %vm591 = vcmp.lt.s32.totalorder %v161, 2
          %v592 = vsel %vm588, 2050, %v590
          %v593 = vsel %vm591, 2050, %v589
          %v594 = vrot.slane %v583, 6
          %v595 = vrot.slane %v585, 6
          %v596 = vsel %vm588, %v594, %v595
          %v597 = vsel %vm588, %v595, %v594
          %v598 = vsel %vm588, 0, %v597
          %v599 = vsel %vm591, 0, %v596
          %vm600 = vcmp.gt.s32.totalorder %v583, 0
          %vm601 = vcmp.gt.s32.totalorder %v585, 0
          %vm602 = vcmp.lt.s32.totalorder %v580, %v592
          %v603 = vsel %vm602, %v580, %v592
          %vm604 = vcmp.lt.s32.totalorder %v581, %v593
          %v605 = vsel %vm604, %v581, %v593
          %v606 = vsel %vm600, %v580, %v603
          %v607 = vsel %vm601, %v581, %v605
          %vm608 = vcmp.gt.s32.totalorder %v583, %v598
          %v609 = vsel %vm608, %v583, %v598
          %vm610 = vcmp.gt.s32.totalorder %v585, %v599
          %v611 = vsel %vm610, %v585, %v599
          %v612 = vrot.slane %v606, 4
          %v613 = vrot.slane %v607, 4
          %vm614 = vcmp.lt.s32.totalorder %v160, 4
          %v615 = vsel %vm614, %v612, %v613
          %v616 = vsel %vm614, %v613, %v612
          %vm617 = vcmp.lt.s32.totalorder %v161, 4
          %v618 = vsel %vm614, 2050, %v616
          %v619 = vsel %vm617, 2050, %v615
          %v620 = vrot.slane %v609, 4
          %v621 = vrot.slane %v611, 4
          %v622 = vsel %vm614, %v620, %v621
          %v623 = vsel %vm614, %v621, %v620
          %v624 = vsel %vm614, 0, %v623
          %v625 = vsel %vm617, 0, %v622
          %vm626 = vcmp.gt.s32.totalorder %v609, 0
          %vm627 = vcmp.gt.s32.totalorder %v611, 0
          %vm628 = vcmp.lt.s32.totalorder %v606, %v618
          %v629 = vsel %vm628, %v606, %v618
          %vm630 = vcmp.lt.s32.totalorder %v607, %v619
          %v631 = vsel %vm630, %v607, %v619
          %v632 = vsel %vm626, %v606, %v629
          %v633 = vsel %vm627, %v607, %v631
          %vm634 = vcmp.gt.s32.totalorder %v609, %v624
          %v635 = vsel %vm634, %v609, %v624
          %vm636 = vcmp.gt.s32.totalorder %v611, %v625
          %v637 = vsel %vm636, %v611, %v625
          %vm638 = vcmp.lt.s32.totalorder %v160, 8
          %vm639 = vcmp.lt.s32.totalorder %v161, 8
          %v640 = vsel %vm638, 2050, %v633
          %v641 = vsel %vm639, 2050, %v632
          %vm642 = vcmp.gt.s32.totalorder %v635, 0
          %vm643 = vcmp.gt.s32.totalorder %v637, 0
          %vm644 = vcmp.lt.s32.totalorder %v632, %v640
          %v645 = vsel %vm644, %v632, %v640
          %vm646 = vcmp.lt.s32.totalorder %v633, %v641
          %v647 = vsel %vm646, %v633, %v641
          %v648 = vsel %vm642, %v632, %v645
          %v649 = vsel %vm643, %v633, %v647
          %v650 = vrot.slane %v648, 1
          %v651 = vrot.slane %v649, 1
          %v652 = vsel %vm199, %v650, %v651
          %v653 = vsel %vm199, %v651, %v650
          %v654 = vsel %vm202, 2050, %v652
          %v655 = vsel %vm203, 2050, %v653
          %v656 = vrot.slane %v176, 1
          %v657 = vrot.slane %v177, 1
          %v658 = vsel %vm199, %v656, %v657
          %v659 = vsel %vm199, %v657, %v656
          %v660 = vsel %vm202, 0, %v658
          %v661 = vsel %vm203, 0, %v659
          %vm662 = vcmp.lt.s32.totalorder %v648, %v654
          %v663 = vsel %vm662, %v648, %v654
          %vm664 = vcmp.lt.s32.totalorder %v649, %v655
          %v665 = vsel %vm664, %v649, %v655
          %v666 = vsel %vm250, %v648, %v663
          %v667 = vsel %vm251, %v649, %v665
          %vm668 = vcmp.gt.s32.totalorder %v176, %v660
          %v669 = vsel %vm668, %v176, %v660
          %vm670 = vcmp.gt.s32.totalorder %v177, %v661
          %v671 = vsel %vm670, %v177, %v661
          %v672 = vrot.slane %v666, 2
          %v673 = vrot.slane %v667, 2
          %vm674 = vcmp.lt.s32.totalorder %v160, 6
          %v675 = vsel %vm674, %v672, %v673
          %v676 = vsel %vm674, %v673, %v672
          %vm677 = vcmp.ge.s32.totalorder %v160, 14
          %vm678 = vcmp.ge.s32.totalorder %v161, 14
          %v679 = vsel %vm677, 2050, %v675
          %v680 = vsel %vm678, 2050, %v676
          %v681 = vrot.slane %v669, 2
          %v682 = vrot.slane %v671, 2
          %v683 = vsel %vm674, %v681, %v682
          %v684 = vsel %vm674, %v682, %v681
          %v685 = vsel %vm677, 0, %v683
          %v686 = vsel %vm678, 0, %v684
          %vm687 = vcmp.gt.s32.totalorder %v669, 0
          %vm688 = vcmp.gt.s32.totalorder %v671, 0
          %vm689 = vcmp.lt.s32.totalorder %v666, %v679
          %v690 = vsel %vm689, %v666, %v679
          %vm691 = vcmp.lt.s32.totalorder %v667, %v680
          %v692 = vsel %vm691, %v667, %v680
          %v693 = vsel %vm687, %v666, %v690
          %v694 = vsel %vm688, %v667, %v692
          %vm695 = vcmp.gt.s32.totalorder %v669, %v685
          %v696 = vsel %vm695, %v669, %v685
          %vm697 = vcmp.gt.s32.totalorder %v671, %v686
          %v698 = vsel %vm697, %v671, %v686
          %v699 = vrot.slane %v693, 4
          %v700 = vrot.slane %v694, 4
          %v701 = vsel %vm614, %v699, %v700
          %v702 = vsel %vm614, %v700, %v699
          %vm703 = vcmp.ge.s32.totalorder %v160, 12
          %vm704 = vcmp.ge.s32.totalorder %v161, 12
          %v705 = vsel %vm703, 2050, %v701
          %v706 = vsel %vm704, 2050, %v702
          %v707 = vrot.slane %v696, 4
          %v708 = vrot.slane %v698, 4
          %v709 = vsel %vm614, %v707, %v708
          %v710 = vsel %vm614, %v708, %v707
          %v711 = vsel %vm703, 0, %v709
          %v712 = vsel %vm704, 0, %v710
          %vm713 = vcmp.gt.s32.totalorder %v696, 0
          %vm714 = vcmp.gt.s32.totalorder %v698, 0
          %vm715 = vcmp.lt.s32.totalorder %v693, %v705
          %v716 = vsel %vm715, %v693, %v705
          %vm717 = vcmp.lt.s32.totalorder %v694, %v706
          %v718 = vsel %vm717, %v694, %v706
          %v719 = vsel %vm713, %v693, %v716
          %v720 = vsel %vm714, %v694, %v718
          %vm721 = vcmp.gt.s32.totalorder %v696, %v711
          %v722 = vsel %vm721, %v696, %v711
          %vm723 = vcmp.gt.s32.totalorder %v698, %v712
          %v724 = vsel %vm723, %v698, %v712
          %vm725 = vcmp.ge.s32.totalorder %v160, 8
          %vm726 = vcmp.ge.s32.totalorder %v161, 8
          %v727 = vsel %vm725, 2050, %v720
          %v728 = vsel %vm726, 2050, %v719
          %vm729 = vcmp.gt.s32.totalorder %v722, 0
          %vm730 = vcmp.gt.s32.totalorder %v724, 0
          %vm731 = vcmp.lt.s32.totalorder %v719, %v727
          %v732 = vsel %vm731, %v719, %v727
          %vm733 = vcmp.lt.s32.totalorder %v720, %v728
          %v734 = vsel %vm733, %v720, %v728
          %v735 = vsel %vm729, %v719, %v732
          %v736 = vsel %vm730, %v720, %v734
          %v737 = vsub.s32 %v179, %v735
          %v738 = vsub.s32 %v180, %v736
          %vm739 = vcmp.gt.s32.totalorder %v737, %v738
          %v740 = vsel %vm739, %v737, %v738
          %v741 = vand.u32 %v740, 65535
          %v742 = vshra.s32 %v740, 16
          %v743 = vcvt.s32.f32 %v741
          %v744 = vcvt.s32.f32 %v742
          %745 = vmax.xlane.f32.xlu0 %v744
          %v746 = vpop.xlane.xlu0 %745
          %vm747 = vcmp.eq.f32.partialorder %v744, %v746
          %v748 = vsel %vm747, %v743, -inf
          %749 = vmax.xlane.f32.xlu0 %v748
          %v750 = vpop.xlane.xlu0 %749
          %v751 = vcvt.f32.s32 %v750
          %v752 = vcvt.f32.s32 %v746
          %v753 = vshll.u32 %v752, 16
          %v754 = vadd.s32 %v753, %v751
          %v755 = vrot.slane %v754, 4
          %vm756 = vcmp.gt.s32.totalorder %v754, %v755
          %v757 = vsel %vm756, %v754, %v755
          %v758 = vrot.slane %v757, 2
          %vm759 = vcmp.gt.s32.totalorder %v757, %v758
          %v760 = vsel %vm759, %v757, %v758
          %v761 = vrot.slane %v760, 1
          %vm762 = vcmp.gt.s32.totalorder %v760, %v761
          %v763 = vsel %vm762, %v760, %v761
          %s764 = vtos %v763
          %s765 = sadd.s32 %s182, 1
        $region33: #{tpu_custom_call.1} parent=23 // loop_footer
          _
        $region34: #{tpu_custom_call.1} parent=23 // loop_footer_branch
          %178 = sbr.rel target = $region30
        $region35: #{tpu_custom_call.1} parent=23 // loop_exit
          _
        %v766 = vsel %vm137, %v179, 0
        %v767 = vsel %vm138, %v180, 0
        %vm768 = vcmp.lt.s32.totalorder %v766, 0
        %vm769 = vcmp.lt.s32.totalorder %v767, 0
        %v770 = vadd.s32 %v766, 2050
        %v771 = vadd.s32 %v767, 2050
        %v772 = vsel %vm768, %v770, 0
        %v773 = vsel %vm769, %v771, 0
        %v774 = vcvt.s32.f32 %v772
        %v775 = vcvt.s32.f32 %v773
        %vm776 = vmxor %vm768, 1
        %vm777 = vmxor %vm769, 1
        %vm778 = vmand %vm137, %vm776
        %vm779 = vmand %vm138, %vm777
        %v780 = vsel %vm778, %v766, 0
        %v781 = vsel %vm779, %v767, 0
        %v782 = vcvt.s32.f32 %v780
        %v783 = vcvt.s32.f32 %v781
        %v784 = vsel %vm157, 1, 0
        %v785 = vsel %vm158, 1, 0
        %v786 = vcvt.s32.f32 %v784
        %v787 = vcvt.s32.f32 %v785
        %v788 = vmax.f32 %v786, %v787
        %789 = vmax.xlane.f32.xlu0 %v788
        %v790 = vpop.xlane.xlu0 %789
        %v791 = vrot.slane %v790, 4
        %v792 = vmax.f32 %v790, %v791
        %v793 = vrot.slane %v792, 2
        %v794 = vmax.f32 %v792, %v793
        %v795 = vrot.slane %v794, 1
        %v796 = vmax.f32 %v794, %v795
        %s797 = vtos %v796
        %v798 = vstv %s797
        %vm799 = vcmp.gt.f32.partialorder %v798, 0.0
        %v800 = vsel %vm799, 1, 0
        %vm801 = vcmp.eq.s32.totalorder %v800, 1
        %v802 = vsel %vm801, %v774, 0.0
        %v803 = vsel %vm801, %v775, 0.0
        %s804 = scalar_lea.vmem %s134, 16 [#allocation5]
        %805 = vst [vmem:[%s804] sm:$0xff] %v802
        %806 = vst [vmem:[%s804 + $0x8] sm:$0xff] %v803
        %v807 = vsel %vm801, %v782, %v141
        %v808 = vsel %vm801, %v783, %v142
        %s809 = scalar_lea.vmem %s134, 32 [#allocation5]
        %810 = vst [vmem:[%s809] sm:$0xff] %v807
        %811 = vst [vmem:[%s809 + $0x8] sm:$0xff] %v808
        %s812 = sand.u32 %s52, 1
        %s813 = scalar_lea.sflag [#allocation4], %s812
        %s814 = sand.u32 %s52, 1
        %s815 = smul.addr %s814, 48
        %s816 = scalar_lea.vmem [#allocation5], %s815
        // Predicated region
        $region36: #{tpu_custom_call.1} parent=23 // pred_check
          %p817 = pneg %p62
        $region37: #{tpu_custom_call.1} parent=23 // pred_check_branch
          %819 = sbr.rel (%p817) target = $region39
        $region38: #{tpu_custom_call.1} parent=23 // pred_region
          %s821 = ssub.s32 768, 768
          %822 = vsyncadd %s813, %s821
          %s823 = smul.addr %s18, 6
          %s824 = smul.addr %s823, 128
          %s825 = scalar_lea.hbm %s1, %s824
          %s826 = sshll.u32 %s816, 4
          %s827 = int_to_ptr.vmem [resolvable:$true] %s826
          %832 = dma.vmem_to_hbm [thread:$0]  %s827, 768, %s825, %s813, 128, 128, 8
        $region39: #{tpu_custom_call.1} parent=23 // pred_fallthru
          _
      $region24: #{tpu_custom_call.1} parent=5 // pred_fallthru
        _
      %p833 = scmp.le.s32.totalorder 2, %s13
      // Predicated region
      $region40: #{tpu_custom_call.1} parent=5 // pred_check
        %p834 = pneg %p833
      $region41: #{tpu_custom_call.1} parent=5 // pred_check_branch
        %836 = sbr.rel (%p834) target = $region43
      $region42: #{tpu_custom_call.1} parent=5 // pred_region
        %s837 = ssub.s32 %s13, 2
        // Predicated region
        $region44: #{tpu_custom_call.1} parent=42 // pred_check
          %p838 = pneg %p68
        $region45: #{tpu_custom_call.1} parent=42 // pred_check_branch
          %840 = sbr.rel (%p838) target = $region47
        $region46: #{tpu_custom_call.1} parent=42 // pred_region
          %s841 = sand.u32 %s53, 1
          %s842 = scalar_lea.sflag [#allocation4], %s841
          %s843 = sand.u32 %s53, 1
          %s844 = smul.addr %s843, 48
          %s845 = scalar_lea.vmem [#allocation5], %s844
          %846 = dma.done %s842, 768
        $region47: #{tpu_custom_call.1} parent=42 // pred_fallthru
          _
      $region43: #{tpu_custom_call.1} parent=5 // pred_fallthru
        _
    $region6: #{tpu_custom_call.1} parent=1 // loop_footer
      %s17 = sadd.s32 1, %s13
    $region7: #{tpu_custom_call.1} parent=1 // loop_footer_branch
      %12 = sbr.rel target = $region3
    $region8: #{tpu_custom_call.1} parent=1 // loop_exit
      _
    %847 = vsyncpa [#allocation3], 1
    %s848 = scalar_lea.sflag [#allocation3], 1
    %849 = vsyncpa %s848, 1
    %850 = vsyncpa [#allocation4], 1
    %s851 = scalar_lea.sflag [#allocation4], 1
    %852 = vsyncpa %s851, 1

</llo_original>
